<compile_context>
chip_gen: v5e
topology: v5e:2x2
jax: 0.10.0
libtpu: 0.0.40
codegen_flags: <defaults>
</compile_context>

<pallas_src>
import numpy as np
import jax
import jax.numpy as jnp
from jax.experimental import pallas as pl
from jax.experimental.pallas import tpu as pltpu


TILE_N = 256  # instance-axis tile; (256, 1024) bf16 ~ 0.5 MiB per pipeline buffer


def mil_kernel(x_ref, w1_ref, b1_ref, m_ref, w2_ref, b2_ref, out_ref, acc_ref):
    """One grid step: TILE_N instances -> partial per-bag aggregates.

    x_ref  : (TILE_N, D)     bf16  flattened NCHW instances (streamed)
    w1_ref : (D, HID)        bf16  prepNN conv-as-matmul weight (resident)
    b1_ref : (1, HID)        f32
    m_ref  : (B_pad, TILE_N) f32   per-bag mean weights (1/count_b or 0, streamed)
    w2_ref : (HID, O)        f32   afterNN linear weight
    b2_ref : (1, O)          f32
    out_ref: (B_pad, O)      f32   bag-level outputs (written on last step only)
    acc_ref: (B_pad, HID)    f32   running per-bag aggregate (VMEM scratch)
    """
    step = pl.program_id(0)

    @pl.when(step == 0)
    def _init():
        acc_ref[...] = jnp.zeros_like(acc_ref)

    # prepNN: full-spatial conv == matmul over flattened C*H*W, then ReLU.
    # bf16 operands feed the MXU natively; accumulate in f32; bias/ReLU in f32.
    feat = jnp.dot(x_ref[...], w1_ref[...], preferred_element_type=jnp.float32)
    feat = jnp.maximum(feat + b1_ref[...], 0.0)                    # (TILE_N, HID)

    # Bag-mean aggregation folded into the pipelined N loop:
    #   acc[b] += sum_i M[b, i] * feat[i]   (M pre-scaled by 1/count_b)
    acc_ref[...] += jnp.dot(m_ref[...], feat, preferred_element_type=jnp.float32)

    @pl.when(step == pl.num_programs(0) - 1)
    def _finalize():
        # afterNN: Linear(HID -> O) + bias, issued once per call (not per tile).
        out_ref[...] = (
            jnp.dot(acc_ref[...], w2_ref[...], preferred_element_type=jnp.float32)
            + b2_ref[...]
        )


def _round_up(x, m):
    return (x + m - 1) // m * m


def bag_model_forward(x_nchw, ids, params, *, tile_n=TILE_N):
    """Forward of BagModel (mean aggregation, single-row ids case).

    Args:
      x_nchw: (N, C, H, W) float32 instances.
      ids:    (1, N) or (N,) int bag ids.
      params: dict with conv weight/bias and linear weight/bias (PyTorch layouts).
    Returns:
      (B, O) bag-level outputs, bags ordered by first appearance in ids.
    """
    ids = np.asarray(ids)
    if ids.ndim == 1:
        ids = ids.reshape(1, -1)
    inner_ids = ids[-1]

    N, C, H, W = x_nchw.shape
    D = C * H * W

    # --- host-side grouping glue (mirrors torch.unique + first-occurrence order) ---
    uniq, inverse, counts = np.unique(inner_ids, return_inverse=True, return_counts=True)
    first_occ = np.array([np.nonzero(inverse == u)[0][0] for u in range(len(uniq))])
    order = np.argsort(first_occ)
    bags = uniq[order]
    counts_ord = counts[order]
    B = len(bags)

    # --- fixed-size padding: bucketed shapes avoid per-(N, B) recompiles and
    #     satisfy the (8, 128) tiling rule for the streamed blocks ---
    N_pad = _round_up(max(N, tile_n), tile_n)
    B_pad = _round_up(max(B, 8), 8)
    grid_n = N_pad // tile_n

    # Per-bag mean weights pre-scaled by 1/count; padded rows/cols stay zero so
    # padded instances / bags contribute exactly nothing.
    M = np.zeros((B_pad, N_pad), dtype=np.float32)
    for i, b in enumerate(bags):
        cols = np.nonzero(inner_ids == b)[0]
        M[i, cols] = 1.0 / counts_ord[i]
    M = jnp.asarray(M)
    # TODO(synk): for very large N, replace the dense (B_pad, N_pad) matrix with
    # PrefetchScalarGridSpec per-bag offset/count tables (grouped-matmul style).

    # --- parameter reshaping (glue) ---
    w_conv = params["conv_w"]                              # (HID, C, H, W)
    HID = w_conv.shape[0]
    w1 = w_conv.reshape(HID, D).T.astype(jnp.bfloat16)     # (D, HID) bf16
    b1 = params["conv_b"].reshape(1, HID).astype(jnp.float32)
    w2 = params["lin_w"].T.astype(jnp.float32)             # (HID, O)
    O = w2.shape[1]
    b2 = params["lin_b"].reshape(1, O).astype(jnp.float32)

    x_flat = x_nchw.reshape(N, D).astype(jnp.bfloat16)
    if N_pad > N:
        x_flat = jnp.concatenate(
            [x_flat, jnp.zeros((N_pad - N, D), jnp.bfloat16)], axis=0)

    cost = pl.CostEstimate(
        flops=2 * N_pad * D * HID + 2 * B_pad * N_pad * HID + 2 * B_pad * HID * O,
        transcendentals=0,
        bytes_accessed=(x_flat.size * 2 + w1.size * 2 + M.size * 4
                        + (b1.size + w2.size + b2.size + B_pad * O) * 4),
    )

    out_pad = pl.pallas_call(
        mil_kernel,
        out_shape=jax.ShapeDtypeStruct((B_pad, O), jnp.float32),
        grid_spec=pltpu.PrefetchScalarGridSpec(
            num_scalar_prefetch=0,
            grid=(grid_n,),
            in_specs=[
                pl.BlockSpec((tile_n, D), lambda i: (i, 0)),      # x: streamed over N
                pl.BlockSpec((D, HID), lambda i: (0, 0)),         # w1: resident
                pl.BlockSpec((1, HID), lambda i: (0, 0)),         # b1: resident
                pl.BlockSpec((B_pad, tile_n), lambda i: (0, i)),  # M: streamed over N
                pl.BlockSpec((HID, O), lambda i: (0, 0)),         # w2: resident
                pl.BlockSpec((1, O), lambda i: (0, 0)),           # b2: resident
            ],
            out_specs=pl.BlockSpec((B_pad, O), lambda i: (0, 0)),
            scratch_shapes=[pltpu.VMEM((B_pad, HID), jnp.float32)],
        ),
        compiler_params=pltpu.CompilerParams(
            # The single grid axis is the reduction over N (accumulator held
            # across it) -> "arbitrary".
            # TODO(synk): for very large N on v7x, add a leading "parallel" split
            # with per-core partial accumulators to use the second TensorCore.
            dimension_semantics=("arbitrary",),
            vmem_limit_bytes=32 * 1024 * 1024,
        ),
        cost_estimate=cost,
    )(x_flat, w1, b1, M, w2, b2)

    out = out_pad[:B]
    # ids.shape[0] == 1 -> PyTorch branch returns just the output.
    return out


def _reference(x_nchw, ids, params):
    """Pure-JAX reference, precision-matched to the kernel (bf16 MXU operands)."""
    ids = np.asarray(ids).reshape(1, -1)
    inner_ids = ids[-1]
    N, C, H, W = x_nchw.shape
    D = C * H * W
    HID = params["conv_w"].shape[0]
    w1 = params["conv_w"].reshape(HID, D).T.astype(jnp.bfloat16)
    x_flat = x_nchw.reshape(N, D).astype(jnp.bfloat16)
    feat = jnp.dot(x_flat, w1, preferred_element_type=jnp.float32)
    feat = jnp.maximum(feat + params["conv_b"].reshape(1, HID), 0.0)
    uniq, inverse, counts = np.unique(inner_ids, return_inverse=True, return_counts=True)
    first_occ = np.array([np.nonzero(inverse == u)[0][0] for u in range(len(uniq))])
    order = np.argsort(first_occ)
    bags = uniq[order]
    agg = jnp.stack([feat[inner_ids == b].mean(axis=0) for b in bags])
    return agg @ params["lin_w"].T + params["lin_b"]


if __name__ == "__main__":
    # Small shapes: N=8 instances, C=4 channels, 16x16 spatial, hidden=32,
    # 3 bags, 2 output classes.
    key = jax.random.PRNGKey(0)
    k_x, k_cw, k_cb, k_lw, k_lb = jax.random.split(key, 5)

    N, C, H, W = 8, 4, 16, 16
    HID, OUT = 32, 2

    x = jax.random.normal(k_x, (N, C, H, W), dtype=jnp.float32)
    ids = np.array([[0, 0, 0, 1, 1, 2, 2, 2]], dtype=np.int64)  # (1, N)

    params = {
        "conv_w": jax.random.normal(k_cw, (HID, C, H, W), dtype=jnp.float32) * 0.02,
        "conv_b": jax.random.normal(k_cb, (HID,), dtype=jnp.float32) * 0.02,
        "lin_w": jax.random.normal(k_lw, (OUT, HID), dtype=jnp.float32) * 0.1,
        "lin_b": jax.random.normal(k_lb, (OUT,), dtype=jnp.float32) * 0.1,
    }

    out = bag_model_forward(x, ids, params)
    out = jax.block_until_ready(out)

    ref = _reference(x, ids, params)
    np.testing.assert_allclose(np.asarray(out), np.asarray(ref), rtol=2e-3, atol=2e-3)

    print("KERNEL_OK")
</pallas_src>

<mosaic_0001>
module attributes {stable_mosaic.version = 11 : i64} {
  func.func @mil_kernel(%arg0: i32, %arg1: memref<256x1024xbf16, #tpu.memory_space<vmem>>, %arg2: memref<1024x32xbf16, #tpu.memory_space<vmem>>, %arg3: memref<1x32xf32, #tpu.memory_space<vmem>>, %arg4: memref<8x256xf32, #tpu.memory_space<vmem>>, %arg5: memref<32x2xf32, #tpu.memory_space<vmem>>, %arg6: memref<1x2xf32, #tpu.memory_space<vmem>>, %arg7: memref<8x2xf32, #tpu.memory_space<vmem>>, %arg8: memref<8x32xf32, #tpu.memory_space<vmem>>) attributes {dimension_semantics = [#tpu.dimension_semantics<arbitrary>], iteration_bounds = array<i64: 1>, scalar_prefetch = 0 : i64, scratch_operands = 1 : i64, tpu.core_type = #tpu.core_type<tc>, window_params = [{transform_indices = @transform_0, window_bounds = array<i64: 256, 1024>}, {pipeline_mode = #tpu.pipeline_mode<synchronous>, transform_indices = @transform_1, window_bounds = array<i64: 1024, 32>}, {pipeline_mode = #tpu.pipeline_mode<synchronous>, transform_indices = @transform_2, window_bounds = array<i64: 1, 32>}, {transform_indices = @transform_3, window_bounds = array<i64: 8, 256>}, {pipeline_mode = #tpu.pipeline_mode<synchronous>, transform_indices = @transform_4, window_bounds = array<i64: 32, 2>}, {pipeline_mode = #tpu.pipeline_mode<synchronous>, transform_indices = @transform_5, window_bounds = array<i64: 1, 2>}, {pipeline_mode = #tpu.pipeline_mode<synchronous>, transform_indices = @transform_6, window_bounds = array<i64: 8, 2>}]} {
    %c0_i32 = arith.constant 0 : i32
    %0 = arith.cmpi eq, %arg0, %c0_i32 : i32
    %1 = arith.extui %0 : i1 to i32
    %c0_i32_0 = arith.constant 0 : i32
    %2 = arith.cmpi ne, %1, %c0_i32_0 : i32
    scf.if %2 {
      %cst_16 = arith.constant 0.000000e+00 : f32
      %19 = vector.broadcast %cst_16 : f32 to vector<8x32xf32>
      %c0_17 = arith.constant 0 : index
      %c0_18 = arith.constant 0 : index
      %20 = vector.load %arg8[%c0_17, %c0_18] : memref<8x32xf32, #tpu.memory_space<vmem>>, vector<8x32xf32>
      tpu.vector_store %arg8[%c0_17, %c0_18], %19 {strides = array<i32>} : memref<8x32xf32, #tpu.memory_space<vmem>>, vector<8x32xf32>,
    } else {
    }
    %c0 = arith.constant 0 : index
    %c0_1 = arith.constant 0 : index
    %3 = vector.load %arg1[%c0, %c0_1] : memref<256x1024xbf16, #tpu.memory_space<vmem>>, vector<256x1024xbf16>
    %c0_2 = arith.constant 0 : index
    %c0_3 = arith.constant 0 : index
    %4 = vector.load %arg2[%c0_2, %c0_3] : memref<1024x32xbf16, #tpu.memory_space<vmem>>, vector<1024x32xbf16>
    %cst = arith.constant dense<0.000000e+00> : vector<256x32xf32>
    %5 = tpu.matmul %3, %4, %cst {dimension_numbers = #tpu.dot_dimension_numbers<[1], [0], [0], [1], [0, 0, 1, 1], [], []>} : vector<256x1024xbf16>, vector<1024x32xbf16>, vector<256x32xf32> -> vector<256x32xf32>
    %c0_4 = arith.constant 0 : index
    %c0_5 = arith.constant 0 : index
    %6 = vector.load %arg3[%c0_4, %c0_5] : memref<1x32xf32, #tpu.memory_space<vmem>>, vector<1x32xf32>
    %7 = vector.broadcast %6 : vector<1x32xf32> to vector<256x32xf32>
    %8 = arith.addf %5, %7 : vector<256x32xf32>
    %cst_6 = arith.constant 0.000000e+00 : f32
    %9 = vector.broadcast %cst_6 : f32 to vector<256x32xf32>
    %10 = arith.maximumf %8, %9 : vector<256x32xf32>
    %c0_7 = arith.constant 0 : index
    %c0_8 = arith.constant 0 : index
    %11 = vector.load %arg8[%c0_7, %c0_8] : memref<8x32xf32, #tpu.memory_space<vmem>>, vector<8x32xf32>
    %c0_9 = arith.constant 0 : index
    %c0_10 = arith.constant 0 : index
    %12 = vector.load %arg4[%c0_9, %c0_10] : memref<8x256xf32, #tpu.memory_space<vmem>>, vector<8x256xf32>
    %cst_11 = arith.constant dense<0.000000e+00> : vector<8x32xf32>
    %13 = tpu.matmul %12, %10, %cst_11 {dimension_numbers = #tpu.dot_dimension_numbers<[1], [0], [0], [1], [0, 0, 1, 1], [], []>} : vector<8x256xf32>, vector<256x32xf32>, vector<8x32xf32> -> vector<8x32xf32>
    %14 = arith.addf %11, %13 : vector<8x32xf32>
    %c0_12 = arith.constant 0 : index
    %c0_13 = arith.constant 0 : index
    %15 = vector.load %arg8[%c0_12, %c0_13] : memref<8x32xf32, #tpu.memory_space<vmem>>, vector<8x32xf32>
    tpu.vector_store %arg8[%c0_12, %c0_13], %14 {strides = array<i32>} : memref<8x32xf32, #tpu.memory_space<vmem>>, vector<8x32xf32>,
    %c0_i32_14 = arith.constant 0 : i32
    %16 = arith.cmpi eq, %arg0, %c0_i32_14 : i32
    %17 = arith.extui %16 : i1 to i32
    %c0_i32_15 = arith.constant 0 : i32
    %18 = arith.cmpi ne, %17, %c0_i32_15 : i32
    scf.if %18 {
      %c0_16 = arith.constant 0 : index
      %c0_17 = arith.constant 0 : index
      %19 = vector.load %arg8[%c0_16, %c0_17] : memref<8x32xf32, #tpu.memory_space<vmem>>, vector<8x32xf32>
      %c0_18 = arith.constant 0 : index
      %c0_19 = arith.constant 0 : index
      %20 = vector.load %arg5[%c0_18, %c0_19] : memref<32x2xf32, #tpu.memory_space<vmem>>, vector<32x2xf32>
      %cst_20 = arith.constant dense<0.000000e+00> : vector<8x2xf32>
      %21 = tpu.matmul %19, %20, %cst_20 {dimension_numbers = #tpu.dot_dimension_numbers<[1], [0], [0], [1], [0, 0, 1, 1], [], []>} : vector<8x32xf32>, vector<32x2xf32>, vector<8x2xf32> -> vector<8x2xf32>
      %c0_21 = arith.constant 0 : index
      %c0_22 = arith.constant 0 : index
      %22 = vector.load %arg6[%c0_21, %c0_22] : memref<1x2xf32, #tpu.memory_space<vmem>>, vector<1x2xf32>
      %23 = vector.broadcast %22 : vector<1x2xf32> to vector<8x2xf32>
      %24 = arith.addf %21, %23 : vector<8x2xf32>
      %c0_23 = arith.constant 0 : index
      %c0_24 = arith.constant 0 : index
      %25 = vector.load %arg7[%c0_23, %c0_24] : memref<8x2xf32, #tpu.memory_space<vmem>>, vector<8x2xf32>
      tpu.vector_store %arg7[%c0_23, %c0_24], %24 {strides = array<i32>} : memref<8x2xf32, #tpu.memory_space<vmem>>, vector<8x2xf32>,
    } else {
    }
    return
  }
  func.func @transform_0(%arg0: i32) -> (i32, i32) {
    %c0_i32 = arith.constant 0 : i32
    %c0_i32_0 = arith.constant 0 : i32
    return %arg0, %c0_i32 : i32, i32
  }
  func.func @transform_1(%arg0: i32) -> (i32, i32) {
    %c0_i32 = arith.constant 0 : i32
    %c0_i32_0 = arith.constant 0 : i32
    %c0_i32_1 = arith.constant 0 : i32
    return %c0_i32, %c0_i32_0 : i32, i32
  }
  func.func @transform_2(%arg0: i32) -> (i32, i32) {
    %c0_i32 = arith.constant 0 : i32
    %c0_i32_0 = arith.constant 0 : i32
    %c0_i32_1 = arith.constant 0 : i32
    return %c0_i32, %c0_i32_0 : i32, i32
  }
  func.func @transform_3(%arg0: i32) -> (i32, i32) {
    %c0_i32 = arith.constant 0 : i32
    %c0_i32_0 = arith.constant 0 : i32
    return %c0_i32, %arg0 : i32, i32
  }
  func.func @transform_4(%arg0: i32) -> (i32, i32) {
    %c0_i32 = arith.constant 0 : i32
    %c0_i32_0 = arith.constant 0 : i32
    %c0_i32_1 = arith.constant 0 : i32
    return %c0_i32, %c0_i32_0 : i32, i32
  }
  func.func @transform_5(%arg0: i32) -> (i32, i32) {
    %c0_i32 = arith.constant 0 : i32
    %c0_i32_0 = arith.constant 0 : i32
    %c0_i32_1 = arith.constant 0 : i32
    return %c0_i32, %c0_i32_0 : i32, i32
  }
  func.func @transform_6(%arg0: i32) -> (i32, i32) {
    %c0_i32 = arith.constant 0 : i32
    %c0_i32_0 = arith.constant 0 : i32
    %c0_i32_1 = arith.constant 0 : i32
    return %c0_i32, %c0_i32_0 : i32, i32
  }
}

</mosaic_0001>

<llo_original>
// kernel: tpu_custom_call.1
$region0: #{tpu_custom_call.1}
  #allocation0 [shape = 'u32[]', space=smem, size = 0x4, offset = 0x4, fixed_abs, tag = 'smem constant byte address 0x4 - core index']
  #allocation1 [shape = 'u32[72,128]{1,0:T(1,128)}', space=vmem, size = 0x9000, scoped, tag = 'internal scratch']
  #allocation2 [shape = 'f32[8,32]{1,0:T(8,128)}', space=vmem, size = 0x1000, scoped, tag = 'scratch operand']
  %s0 = inlined_call_operand.hbm [shape: bf16[256,1024], index: 0, kind: input, shape index: {}]
  %s1 = inlined_call_operand.vmem [shape: bf16[1024,32], index: 1, kind: input, shape index: {}]
  %s2 = inlined_call_operand.vmem [shape: f32[1,32], index: 2, kind: input, shape index: {}]
  %s3 = inlined_call_operand.vmem [shape: f32[8,256], index: 3, kind: input, shape index: {}]
  %s4 = inlined_call_operand.vmem [shape: f32[32,2], index: 4, kind: input, shape index: {}]
  %s5 = inlined_call_operand.vmem [shape: f32[1,2], index: 5, kind: input, shape index: {}]
  %s6 = inlined_call_operand.vmem [shape: f32[8,2], index: 6, kind: output, shape index: {}]
  %s7 = sld [smem:[#allocation0]]
  $region46: #{tpu_custom_call.1} parent=0
    _
  %s9 = ssub.s32 1, %s7
  %s10 = scalar_select 0, %s9, %s7
  $region1: #{tpu_custom_call.1} parent=0
    #allocation3 [shape = 'u8[524288]{0}', space=vmem, size = 0x80000, scoped, tag = 'input window, operand 0, single buffered']
    #allocation4 [shape = 's32[1]{0}', space=sflag, size = 0x4, scoped, tag = 'scoped memory for tpu_custom_call.1']
    %11 = vsyncpa [#allocation4], 0
    // Predicated region
    $region2: #{tpu_custom_call.1} parent=1 // pred_check
      _
    $region3: #{tpu_custom_call.1} parent=1 // pred_check_branch
      %13 = sbr.rel (0) target = $region5
    $region4: #{tpu_custom_call.1} parent=1 // pred_region
      %15 = vsyncadd [#allocation4], 0
      %s16 = sshll.u32 %s0, 4
      %s17 = int_to_ptr.hbm [resolvable:$true] %s16
      %s18 = sshll.u32 [#allocation3], 4
      %s19 = int_to_ptr.vmem [resolvable:$true] %s18
      %24 = dma.hbm_to_vmem [thread:$0]  %s17, 16384, %s19, [#allocation4], 512, 512, 32
    $region5: #{tpu_custom_call.1} parent=1 // pred_fallthru
      _
    // Predicated region
    $region6: #{tpu_custom_call.1} parent=1 // pred_check
      _
    $region7: #{tpu_custom_call.1} parent=1 // pred_check_branch
      %26 = sbr.rel (0) target = $region9
    $region8: #{tpu_custom_call.1} parent=1 // pred_region
      _
    $region9: #{tpu_custom_call.1} parent=1 // pred_fallthru
      _
    // Predicated region
    $region10: #{tpu_custom_call.1} parent=1 // pred_check
      _
    $region11: #{tpu_custom_call.1} parent=1 // pred_check_branch
      %28 = sbr.rel (0) target = $region13
    $region12: #{tpu_custom_call.1} parent=1 // pred_region
      _
    $region13: #{tpu_custom_call.1} parent=1 // pred_fallthru
      _
    // Predicated region
    $region14: #{tpu_custom_call.1} parent=1 // pred_check
      _
    $region15: #{tpu_custom_call.1} parent=1 // pred_check_branch
      %30 = sbr.rel (0) target = $region17
    $region16: #{tpu_custom_call.1} parent=1 // pred_region
      _
    $region17: #{tpu_custom_call.1} parent=1 // pred_fallthru
      _
    // Predicated region
    $region18: #{tpu_custom_call.1} parent=1 // pred_check
      _
    $region19: #{tpu_custom_call.1} parent=1 // pred_check_branch
      %32 = sbr.rel (0) target = $region21
    $region20: #{tpu_custom_call.1} parent=1 // pred_region
      _
    $region21: #{tpu_custom_call.1} parent=1 // pred_fallthru
      _
    // Predicated region
    $region22: #{tpu_custom_call.1} parent=1 // pred_check
      _
    $region23: #{tpu_custom_call.1} parent=1 // pred_check_branch
      %34 = sbr.rel (0) target = $region25
    $region24: #{tpu_custom_call.1} parent=1 // pred_region
      _
    $region25: #{tpu_custom_call.1} parent=1 // pred_fallthru
      _
    // Predicated region
    $region26: #{tpu_custom_call.1} parent=1 // pred_check
      _
    $region27: #{tpu_custom_call.1} parent=1 // pred_check_branch
      %36 = sbr.rel (0) target = $region29
    $region28: #{tpu_custom_call.1} parent=1 // pred_region
      %38 = dma.done [#allocation4], 16384
    $region29: #{tpu_custom_call.1} parent=1 // pred_fallthru
      _
    %p39 = scmp.eq.s32.totalorder 0, 0
    // Predicated region
    $region30: #{tpu_custom_call.1} parent=1 // pred_check
      %p40 = pneg %p39
    $region31: #{tpu_custom_call.1} parent=1 // pred_check_branch
      %42 = sbr.rel (%p40) target = $region33
    $region32: #{tpu_custom_call.1} parent=1 // pred_region
      %vm43 = vcmask 261120
      %44 = vst.msk [vmem:[#allocation2] sm:$0xff] %vm43, 0.0
    $region33: #{tpu_custom_call.1} parent=1 // pred_fallthru
      _
    %v45 = vld [vmem:[#allocation3] sm:$0xff]
    %v46 = vld [vmem:[#allocation3 + $0x8] sm:$0xff]
    %v47 = vld [vmem:[#allocation3 + $0x10] sm:$0xff]
    %v48 = vld [vmem:[#allocation3 + $0x18] sm:$0xff]
    %v49 = vld [vmem:[#allocation3 + $0x20] sm:$0xff]
    %v50 = vld [vmem:[#allocation3 + $0x28] sm:$0xff]
    %v51 = vld [vmem:[#allocation3 + $0x30] sm:$0xff]
    %v52 = vld [vmem:[#allocation3 + $0x38] sm:$0xff]
    %v53 = vld [vmem:[#allocation3 + $0x40] sm:$0xff]
    %v54 = vld [vmem:[#allocation3 + $0x48] sm:$0xff]
    %v55 = vld [vmem:[#allocation3 + $0x50] sm:$0xff]
    %v56 = vld [vmem:[#allocation3 + $0x58] sm:$0xff]
    %v57 = vld [vmem:[#allocation3 + $0x60] sm:$0xff]
    %v58 = vld [vmem:[#allocation3 + $0x68] sm:$0xff]
    %v59 = vld [vmem:[#allocation3 + $0x70] sm:$0xff]
    %v60 = vld [vmem:[#allocation3 + $0x78] sm:$0xff]
    %v61 = vld [vmem:[#allocation3 + $0x80] sm:$0xff]
    %v62 = vld [vmem:[#allocation3 + $0x88] sm:$0xff]
    %v63 = vld [vmem:[#allocation3 + $0x90] sm:$0xff]
    %v64 = vld [vmem:[#allocation3 + $0x98] sm:$0xff]
    %v65 = vld [vmem:[#allocation3 + $0xa0] sm:$0xff]
    %v66 = vld [vmem:[#allocation3 + $0xa8] sm:$0xff]
    %v67 = vld [vmem:[#allocation3 + $0xb0] sm:$0xff]
    %v68 = vld [vmem:[#allocation3 + $0xb8] sm:$0xff]
    %v69 = vld [vmem:[#allocation3 + $0xc0] sm:$0xff]
    %v70 = vld [vmem:[#allocation3 + $0xc8] sm:$0xff]
    %v71 = vld [vmem:[#allocation3 + $0xd0] sm:$0xff]
    %v72 = vld [vmem:[#allocation3 + $0xd8] sm:$0xff]
    %v73 = vld [vmem:[#allocation3 + $0xe0] sm:$0xff]
    %v74 = vld [vmem:[#allocation3 + $0xe8] sm:$0xff]
    %v75 = vld [vmem:[#allocation3 + $0xf0] sm:$0xff]
    %v76 = vld [vmem:[#allocation3 + $0xf8] sm:$0xff]
    %v77 = vld [vmem:[#allocation3 + $0x100] sm:$0xff]
    %v78 = vld [vmem:[#allocation3 + $0x108] sm:$0xff]
    %v79 = vld [vmem:[#allocation3 + $0x110] sm:$0xff]
    %v80 = vld [vmem:[#allocation3 + $0x118] sm:$0xff]
    %v81 = vld [vmem:[#allocation3 + $0x120] sm:$0xff]
    %v82 = vld [vmem:[#allocation3 + $0x128] sm:$0xff]
    %v83 = vld [vmem:[#allocation3 + $0x130] sm:$0xff]
    %v84 = vld [vmem:[#allocation3 + $0x138] sm:$0xff]
    %v85 = vld [vmem:[#allocation3 + $0x140] sm:$0xff]
    %v86 = vld [vmem:[#allocation3 + $0x148] sm:$0xff]
    %v87 = vld [vmem:[#allocation3 + $0x150] sm:$0xff]
    %v88 = vld [vmem:[#allocation3 + $0x158] sm:$0xff]
    %v89 = vld [vmem:[#allocation3 + $0x160] sm:$0xff]
    %v90 = vld [vmem:[#allocation3 + $0x168] sm:$0xff]
    %v91 = vld [vmem:[#allocation3 + $0x170] sm:$0xff]
    %v92 = vld [vmem:[#allocation3 + $0x178] sm:$0xff]
    %v93 = vld [vmem:[#allocation3 + $0x180] sm:$0xff]
    %v94 = vld [vmem:[#allocation3 + $0x188] sm:$0xff]
    %v95 = vld [vmem:[#allocation3 + $0x190] sm:$0xff]
    %v96 = vld [vmem:[#allocation3 + $0x198] sm:$0xff]
    %v97 = vld [vmem:[#allocation3 + $0x1a0] sm:$0xff]
    %v98 = vld [vmem:[#allocation3 + $0x1a8] sm:$0xff]
    %v99 = vld [vmem:[#allocation3 + $0x1b0] sm:$0xff]
    %v100 = vld [vmem:[#allocation3 + $0x1b8] sm:$0xff]
    %v101 = vld [vmem:[#allocation3 + $0x1c0] sm:$0xff]
    %v102 = vld [vmem:[#allocation3 + $0x1c8] sm:$0xff]
    %v103 = vld [vmem:[#allocation3 + $0x1d0] sm:$0xff]
    %v104 = vld [vmem:[#allocation3 + $0x1d8] sm:$0xff]
    %v105 = vld [vmem:[#allocation3 + $0x1e0] sm:$0xff]
    %v106 = vld [vmem:[#allocation3 + $0x1e8] sm:$0xff]
    %v107 = vld [vmem:[#allocation3 + $0x1f0] sm:$0xff]
    %v108 = vld [vmem:[#allocation3 + $0x1f8] sm:$0xff]
    %v109 = vld [vmem:[#allocation3 + $0x200] sm:$0xff]
    %v110 = vld [vmem:[#allocation3 + $0x208] sm:$0xff]
    %v111 = vld [vmem:[#allocation3 + $0x210] sm:$0xff]
    %v112 = vld [vmem:[#allocation3 + $0x218] sm:$0xff]
    %v113 = vld [vmem:[#allocation3 + $0x220] sm:$0xff]
    %v114 = vld [vmem:[#allocation3 + $0x228] sm:$0xff]
    %v115 = vld [vmem:[#allocation3 + $0x230] sm:$0xff]
    %v116 = vld [vmem:[#allocation3 + $0x238] sm:$0xff]
    %v117 = vld [vmem:[#allocation3 + $0x240] sm:$0xff]
    %v118 = vld [vmem:[#allocation3 + $0x248] sm:$0xff]
    %v119 = vld [vmem:[#allocation3 + $0x250] sm:$0xff]
    %v120 = vld [vmem:[#allocation3 + $0x258] sm:$0xff]
    %v121 = vld [vmem:[#allocation3 + $0x260] sm:$0xff]
    %v122 = vld [vmem:[#allocation3 + $0x268] sm:$0xff]
    %v123 = vld [vmem:[#allocation3 + $0x270] sm:$0xff]
    %v124 = vld [vmem:[#allocation3 + $0x278] sm:$0xff]
    %v125 = vld [vmem:[#allocation3 + $0x280] sm:$0xff]
    %v126 = vld [vmem:[#allocation3 + $0x288] sm:$0xff]
    %v127 = vld [vmem:[#allocation3 + $0x290] sm:$0xff]
    %v128 = vld [vmem:[#allocation3 + $0x298] sm:$0xff]
    %v129 = vld [vmem:[#allocation3 + $0x2a0] sm:$0xff]
    %v130 = vld [vmem:[#allocation3 + $0x2a8] sm:$0xff]
    %v131 = vld [vmem:[#allocation3 + $0x2b0] sm:$0xff]
    %v132 = vld [vmem:[#allocation3 + $0x2b8] sm:$0xff]
    %v133 = vld [vmem:[#allocation3 + $0x2c0] sm:$0xff]
    %v134 = vld [vmem:[#allocation3 + $0x2c8] sm:$0xff]
    %v135 = vld [vmem:[#allocation3 + $0x2d0] sm:$0xff]
    %v136 = vld [vmem:[#allocation3 + $0x2d8] sm:$0xff]
    %v137 = vld [vmem:[#allocation3 + $0x2e0] sm:$0xff]
    %v138 = vld [vmem:[#allocation3 + $0x2e8] sm:$0xff]
    %v139 = vld [vmem:[#allocation3 + $0x2f0] sm:$0xff]
    %v140 = vld [vmem:[#allocation3 + $0x2f8] sm:$0xff]
    %v141 = vld [vmem:[#allocation3 + $0x300] sm:$0xff]
    %v142 = vld [vmem:[#allocation3 + $0x308] sm:$0xff]
    %v143 = vld [vmem:[#allocation3 + $0x310] sm:$0xff]
    %v144 = vld [vmem:[#allocation3 + $0x318] sm:$0xff]
    %v145 = vld [vmem:[#allocation3 + $0x320] sm:$0xff]
    %v146 = vld [vmem:[#allocation3 + $0x328] sm:$0xff]
    %v147 = vld [vmem:[#allocation3 + $0x330] sm:$0xff]
    %v148 = vld [vmem:[#allocation3 + $0x338] sm:$0xff]
    %v149 = vld [vmem:[#allocation3 + $0x340] sm:$0xff]
    %v150 = vld [vmem:[#allocation3 + $0x348] sm:$0xff]
    %v151 = vld [vmem:[#allocation3 + $0x350] sm:$0xff]
    %v152 = vld [vmem:[#allocation3 + $0x358] sm:$0xff]
    %v153 = vld [vmem:[#allocation3 + $0x360] sm:$0xff]
    %v154 = vld [vmem:[#allocation3 + $0x368] sm:$0xff]
    %v155 = vld [vmem:[#allocation3 + $0x370] sm:$0xff]
    %v156 = vld [vmem:[#allocation3 + $0x378] sm:$0xff]
    %v157 = vld [vmem:[#allocation3 + $0x380] sm:$0xff]
    %v158 = vld [vmem:[#allocation3 + $0x388] sm:$0xff]
    %v159 = vld [vmem:[#allocation3 + $0x390] sm:$0xff]
    %v160 = vld [vmem:[#allocation3 + $0x398] sm:$0xff]
    %v161 = vld [vmem:[#allocation3 + $0x3a0] sm:$0xff]
    %v162 = vld [vmem:[#allocation3 + $0x3a8] sm:$0xff]
    %v163 = vld [vmem:[#allocation3 + $0x3b0] sm:$0xff]
    %v164 = vld [vmem:[#allocation3 + $0x3b8] sm:$0xff]
    %v165 = vld [vmem:[#allocation3 + $0x3c0] sm:$0xff]
    %v166 = vld [vmem:[#allocation3 + $0x3c8] sm:$0xff]
    %v167 = vld [vmem:[#allocation3 + $0x3d0] sm:$0xff]
    %v168 = vld [vmem:[#allocation3 + $0x3d8] sm:$0xff]
    %v169 = vld [vmem:[#allocation3 + $0x3e0] sm:$0xff]
    %v170 = vld [vmem:[#allocation3 + $0x3e8] sm:$0xff]
    %v171 = vld [vmem:[#allocation3 + $0x3f0] sm:$0xff]
    %v172 = vld [vmem:[#allocation3 + $0x3f8] sm:$0xff]
    %v173 = vld [vmem:[%s1] sm:$0xf]
    %v174 = vld [vmem:[%s1 + $0x4] sm:$0xf]
    %v175 = vld [vmem:[%s1 + $0x8] sm:$0xf]
    %v176 = vld [vmem:[%s1 + $0xc] sm:$0xf]
    %v177 = vld [vmem:[%s1 + $0x10] sm:$0xf]
    %v178 = vld [vmem:[%s1 + $0x14] sm:$0xf]
    %v179 = vld [vmem:[%s1 + $0x18] sm:$0xf]
    %v180 = vld [vmem:[%s1 + $0x1c] sm:$0xf]
    %v181 = vld [vmem:[%s1 + $0x20] sm:$0xf]
    %v182 = vld [vmem:[%s1 + $0x24] sm:$0xf]
    %v183 = vld [vmem:[%s1 + $0x28] sm:$0xf]
    %v184 = vld [vmem:[%s1 + $0x2c] sm:$0xf]
    %v185 = vld [vmem:[%s1 + $0x30] sm:$0xf]
    %v186 = vld [vmem:[%s1 + $0x34] sm:$0xf]
    %v187 = vld [vmem:[%s1 + $0x38] sm:$0xf]
    %v188 = vld [vmem:[%s1 + $0x3c] sm:$0xf]
    %v189 = vld [vmem:[%s1 + $0x40] sm:$0xf]
    %v190 = vld [vmem:[%s1 + $0x44] sm:$0xf]
    %v191 = vld [vmem:[%s1 + $0x48] sm:$0xf]
    %v192 = vld [vmem:[%s1 + $0x4c] sm:$0xf]
    %v193 = vld [vmem:[%s1 + $0x50] sm:$0xf]
    %v194 = vld [vmem:[%s1 + $0x54] sm:$0xf]
    %v195 = vld [vmem:[%s1 + $0x58] sm:$0xf]
    %v196 = vld [vmem:[%s1 + $0x5c] sm:$0xf]
    %v197 = vld [vmem:[%s1 + $0x60] sm:$0xf]
    %v198 = vld [vmem:[%s1 + $0x64] sm:$0xf]
    %v199 = vld [vmem:[%s1 + $0x68] sm:$0xf]
    %v200 = vld [vmem:[%s1 + $0x6c] sm:$0xf]
    %v201 = vld [vmem:[%s1 + $0x70] sm:$0xf]
    %v202 = vld [vmem:[%s1 + $0x74] sm:$0xf]
    %v203 = vld [vmem:[%s1 + $0x78] sm:$0xf]
    %v204 = vld [vmem:[%s1 + $0x7c] sm:$0xf]
    %v205 = vld [vmem:[%s1 + $0x80] sm:$0xf]
    %v206 = vld [vmem:[%s1 + $0x84] sm:$0xf]
    %v207 = vld [vmem:[%s1 + $0x88] sm:$0xf]
    %v208 = vld [vmem:[%s1 + $0x8c] sm:$0xf]
    %v209 = vld [vmem:[%s1 + $0x90] sm:$0xf]
    %v210 = vld [vmem:[%s1 + $0x94] sm:$0xf]
    %v211 = vld [vmem:[%s1 + $0x98] sm:$0xf]
    %v212 = vld [vmem:[%s1 + $0x9c] sm:$0xf]
    %v213 = vld [vmem:[%s1 + $0xa0] sm:$0xf]
    %v214 = vld [vmem:[%s1 + $0xa4] sm:$0xf]
    %v215 = vld [vmem:[%s1 + $0xa8] sm:$0xf]
    %v216 = vld [vmem:[%s1 + $0xac] sm:$0xf]
    %v217 = vld [vmem:[%s1 + $0xb0] sm:$0xf]
    %v218 = vld [vmem:[%s1 + $0xb4] sm:$0xf]
    %v219 = vld [vmem:[%s1 + $0xb8] sm:$0xf]
    %v220 = vld [vmem:[%s1 + $0xbc] sm:$0xf]
    %v221 = vld [vmem:[%s1 + $0xc0] sm:$0xf]
    %v222 = vld [vmem:[%s1 + $0xc4] sm:$0xf]
    %v223 = vld [vmem:[%s1 + $0xc8] sm:$0xf]
    %v224 = vld [vmem:[%s1 + $0xcc] sm:$0xf]
    %v225 = vld [vmem:[%s1 + $0xd0] sm:$0xf]
    %v226 = vld [vmem:[%s1 + $0xd4] sm:$0xf]
    %v227 = vld [vmem:[%s1 + $0xd8] sm:$0xf]
    %v228 = vld [vmem:[%s1 + $0xdc] sm:$0xf]
    %v229 = vld [vmem:[%s1 + $0xe0] sm:$0xf]
    %v230 = vld [vmem:[%s1 + $0xe4] sm:$0xf]
    %v231 = vld [vmem:[%s1 + $0xe8] sm:$0xf]
    %v232 = vld [vmem:[%s1 + $0xec] sm:$0xf]
    %v233 = vld [vmem:[%s1 + $0xf0] sm:$0xf]
    %v234 = vld [vmem:[%s1 + $0xf4] sm:$0xf]
    %v235 = vld [vmem:[%s1 + $0xf8] sm:$0xf]
    %v236 = vld [vmem:[%s1 + $0xfc] sm:$0xf]
    %v237 = vld [vmem:[%s1 + $0x100] sm:$0xf]
    %v238 = vld [vmem:[%s1 + $0x104] sm:$0xf]
    %v239 = vld [vmem:[%s1 + $0x108] sm:$0xf]
    %v240 = vld [vmem:[%s1 + $0x10c] sm:$0xf]
    %v241 = vld [vmem:[%s1 + $0x110] sm:$0xf]
    %v242 = vld [vmem:[%s1 + $0x114] sm:$0xf]
    %v243 = vld [vmem:[%s1 + $0x118] sm:$0xf]
    %v244 = vld [vmem:[%s1 + $0x11c] sm:$0xf]
    %v245 = vld [vmem:[%s1 + $0x120] sm:$0xf]
    %v246 = vld [vmem:[%s1 + $0x124] sm:$0xf]
    %v247 = vld [vmem:[%s1 + $0x128] sm:$0xf]
    %v248 = vld [vmem:[%s1 + $0x12c] sm:$0xf]
    %v249 = vld [vmem:[%s1 + $0x130] sm:$0xf]
    %v250 = vld [vmem:[%s1 + $0x134] sm:$0xf]
    %v251 = vld [vmem:[%s1 + $0x138] sm:$0xf]
    %v252 = vld [vmem:[%s1 + $0x13c] sm:$0xf]
    %v253 = vld [vmem:[%s1 + $0x140] sm:$0xf]
    %v254 = vld [vmem:[%s1 + $0x144] sm:$0xf]
    %v255 = vld [vmem:[%s1 + $0x148] sm:$0xf]
    %v256 = vld [vmem:[%s1 + $0x14c] sm:$0xf]
    %v257 = vld [vmem:[%s1 + $0x150] sm:$0xf]
    %v258 = vld [vmem:[%s1 + $0x154] sm:$0xf]
    %v259 = vld [vmem:[%s1 + $0x158] sm:$0xf]
    %v260 = vld [vmem:[%s1 + $0x15c] sm:$0xf]
    %v261 = vld [vmem:[%s1 + $0x160] sm:$0xf]
    %v262 = vld [vmem:[%s1 + $0x164] sm:$0xf]
    %v263 = vld [vmem:[%s1 + $0x168] sm:$0xf]
    %v264 = vld [vmem:[%s1 + $0x16c] sm:$0xf]
    %v265 = vld [vmem:[%s1 + $0x170] sm:$0xf]
    %v266 = vld [vmem:[%s1 + $0x174] sm:$0xf]
    %v267 = vld [vmem:[%s1 + $0x178] sm:$0xf]
    %v268 = vld [vmem:[%s1 + $0x17c] sm:$0xf]
    %v269 = vld [vmem:[%s1 + $0x180] sm:$0xf]
    %v270 = vld [vmem:[%s1 + $0x184] sm:$0xf]
    %v271 = vld [vmem:[%s1 + $0x188] sm:$0xf]
    %v272 = vld [vmem:[%s1 + $0x18c] sm:$0xf]
    %v273 = vld [vmem:[%s1 + $0x190] sm:$0xf]
    %v274 = vld [vmem:[%s1 + $0x194] sm:$0xf]
    %v275 = vld [vmem:[%s1 + $0x198] sm:$0xf]
    %v276 = vld [vmem:[%s1 + $0x19c] sm:$0xf]
    %v277 = vld [vmem:[%s1 + $0x1a0] sm:$0xf]
    %v278 = vld [vmem:[%s1 + $0x1a4] sm:$0xf]
    %v279 = vld [vmem:[%s1 + $0x1a8] sm:$0xf]
    %v280 = vld [vmem:[%s1 + $0x1ac] sm:$0xf]
    %v281 = vld [vmem:[%s1 + $0x1b0] sm:$0xf]
    %v282 = vld [vmem:[%s1 + $0x1b4] sm:$0xf]
    %v283 = vld [vmem:[%s1 + $0x1b8] sm:$0xf]
    %v284 = vld [vmem:[%s1 + $0x1bc] sm:$0xf]
    %v285 = vld [vmem:[%s1 + $0x1c0] sm:$0xf]
    %v286 = vld [vmem:[%s1 + $0x1c4] sm:$0xf]
    %v287 = vld [vmem:[%s1 + $0x1c8] sm:$0xf]
    %v288 = vld [vmem:[%s1 + $0x1cc] sm:$0xf]
    %v289 = vld [vmem:[%s1 + $0x1d0] sm:$0xf]
    %v290 = vld [vmem:[%s1 + $0x1d4] sm:$0xf]
    %v291 = vld [vmem:[%s1 + $0x1d8] sm:$0xf]
    %v292 = vld [vmem:[%s1 + $0x1dc] sm:$0xf]
    %v293 = vld [vmem:[%s1 + $0x1e0] sm:$0xf]
    %v294 = vld [vmem:[%s1 + $0x1e4] sm:$0xf]
    %v295 = vld [vmem:[%s1 + $0x1e8] sm:$0xf]
    %v296 = vld [vmem:[%s1 + $0x1ec] sm:$0xf]
    %v297 = vld [vmem:[%s1 + $0x1f0] sm:$0xf]
    %v298 = vld [vmem:[%s1 + $0x1f4] sm:$0xf]
    %v299 = vld [vmem:[%s1 + $0x1f8] sm:$0xf]
    %v300 = vld [vmem:[%s1 + $0x1fc] sm:$0xf]
    %v301 = vld [vmem:[%s2] sm:$0x1]
    %v303 = vperm.slane %v301, 0
    %v433 = vunpack.c.l.b16 %v45
    %v434 = vunpack.c.h.b16 %v45
    %v435 = vunpack.c.l.b16 %v46
    %v436 = vunpack.c.h.b16 %v46
    %v437 = vunpack.c.l.b16 %v47
    %v438 = vunpack.c.h.b16 %v47
    %v439 = vunpack.c.l.b16 %v48
    %v440 = vunpack.c.h.b16 %v48
    %v441 = vunpack.c.l.b16 %v49
    %v442 = vunpack.c.h.b16 %v49
    %v443 = vunpack.c.l.b16 %v50
    %v444 = vunpack.c.h.b16 %v50
    %v445 = vunpack.c.l.b16 %v51
    %v446 = vunpack.c.h.b16 %v51
    %v447 = vunpack.c.l.b16 %v52
    %v448 = vunpack.c.h.b16 %v52
    %v449 = vunpack.c.l.b16 %v53
    %v450 = vunpack.c.h.b16 %v53
    %v451 = vunpack.c.l.b16 %v54
    %v452 = vunpack.c.h.b16 %v54
    %v453 = vunpack.c.l.b16 %v55
    %v454 = vunpack.c.h.b16 %v55
    %v455 = vunpack.c.l.b16 %v56
    %v456 = vunpack.c.h.b16 %v56
    %v457 = vunpack.c.l.b16 %v57
    %v458 = vunpack.c.h.b16 %v57
    %v459 = vunpack.c.l.b16 %v58
    %v460 = vunpack.c.h.b16 %v58
    %v461 = vunpack.c.l.b16 %v59
    %v462 = vunpack.c.h.b16 %v59
    %v463 = vunpack.c.l.b16 %v60
    %v464 = vunpack.c.h.b16 %v60
    %v465 = vunpack.c.l.b16 %v61
    %v466 = vunpack.c.h.b16 %v61
    %v467 = vunpack.c.l.b16 %v62
    %v468 = vunpack.c.h.b16 %v62
    %v469 = vunpack.c.l.b16 %v63
    %v470 = vunpack.c.h.b16 %v63
    %v471 = vunpack.c.l.b16 %v64
    %v472 = vunpack.c.h.b16 %v64
    %v473 = vunpack.c.l.b16 %v65
    %v474 = vunpack.c.h.b16 %v65
    %v475 = vunpack.c.l.b16 %v66
    %v476 = vunpack.c.h.b16 %v66
    %v477 = vunpack.c.l.b16 %v67
    %v478 = vunpack.c.h.b16 %v67
    %v479 = vunpack.c.l.b16 %v68
    %v480 = vunpack.c.h.b16 %v68
    %v481 = vunpack.c.l.b16 %v69
    %v482 = vunpack.c.h.b16 %v69
    %v483 = vunpack.c.l.b16 %v70
    %v484 = vunpack.c.h.b16 %v70
    %v485 = vunpack.c.l.b16 %v71
    %v486 = vunpack.c.h.b16 %v71
    %v487 = vunpack.c.l.b16 %v72
    %v488 = vunpack.c.h.b16 %v72
    %v489 = vunpack.c.l.b16 %v73
    %v490 = vunpack.c.h.b16 %v73
    %v491 = vunpack.c.l.b16 %v74
    %v492 = vunpack.c.h.b16 %v74
    %v493 = vunpack.c.l.b16 %v75
    %v494 = vunpack.c.h.b16 %v75
    %v495 = vunpack.c.l.b16 %v76
    %v496 = vunpack.c.h.b16 %v76
    %v497 = vunpack.c.l.b16 %v77
    %v498 = vunpack.c.h.b16 %v77
    %v499 = vunpack.c.l.b16 %v78
    %v500 = vunpack.c.h.b16 %v78
    %v501 = vunpack.c.l.b16 %v79
    %v502 = vunpack.c.h.b16 %v79
    %v503 = vunpack.c.l.b16 %v80
    %v504 = vunpack.c.h.b16 %v80
    %v505 = vunpack.c.l.b16 %v81
    %v506 = vunpack.c.h.b16 %v81
    %v507 = vunpack.c.l.b16 %v82
    %v508 = vunpack.c.h.b16 %v82
    %v509 = vunpack.c.l.b16 %v83
    %v510 = vunpack.c.h.b16 %v83
    %v511 = vunpack.c.l.b16 %v84
    %v512 = vunpack.c.h.b16 %v84
    %v513 = vunpack.c.l.b16 %v85
    %v514 = vunpack.c.h.b16 %v85
    %v515 = vunpack.c.l.b16 %v86
    %v516 = vunpack.c.h.b16 %v86
    %v517 = vunpack.c.l.b16 %v87
    %v518 = vunpack.c.h.b16 %v87
    %v519 = vunpack.c.l.b16 %v88
    %v520 = vunpack.c.h.b16 %v88
    %v521 = vunpack.c.l.b16 %v89
    %v522 = vunpack.c.h.b16 %v89
    %v523 = vunpack.c.l.b16 %v90
    %v524 = vunpack.c.h.b16 %v90
    %v525 = vunpack.c.l.b16 %v91
    %v526 = vunpack.c.h.b16 %v91
    %v527 = vunpack.c.l.b16 %v92
    %v528 = vunpack.c.h.b16 %v92
    %v529 = vunpack.c.l.b16 %v93
    %v530 = vunpack.c.h.b16 %v93
    %v531 = vunpack.c.l.b16 %v94
    %v532 = vunpack.c.h.b16 %v94
    %v533 = vunpack.c.l.b16 %v95
    %v534 = vunpack.c.h.b16 %v95
    %v535 = vunpack.c.l.b16 %v96
    %v536 = vunpack.c.h.b16 %v96
    %v537 = vunpack.c.l.b16 %v97
    %v538 = vunpack.c.h.b16 %v97
    %v539 = vunpack.c.l.b16 %v98
    %v540 = vunpack.c.h.b16 %v98
    %v541 = vunpack.c.l.b16 %v99
    %v542 = vunpack.c.h.b16 %v99
    %v543 = vunpack.c.l.b16 %v100
    %v544 = vunpack.c.h.b16 %v100
    %v545 = vunpack.c.l.b16 %v101
    %v546 = vunpack.c.h.b16 %v101
    %v547 = vunpack.c.l.b16 %v102
    %v548 = vunpack.c.h.b16 %v102
    %v549 = vunpack.c.l.b16 %v103
    %v550 = vunpack.c.h.b16 %v103
    %v551 = vunpack.c.l.b16 %v104
    %v552 = vunpack.c.h.b16 %v104
    %v553 = vunpack.c.l.b16 %v105
    %v554 = vunpack.c.h.b16 %v105
    %v555 = vunpack.c.l.b16 %v106
    %v556 = vunpack.c.h.b16 %v106
    %v557 = vunpack.c.l.b16 %v107
    %v558 = vunpack.c.h.b16 %v107
    %v559 = vunpack.c.l.b16 %v108
    %v560 = vunpack.c.h.b16 %v108
    %v561 = vunpack.c.l.b16 %v109
    %v562 = vunpack.c.h.b16 %v109
    %v563 = vunpack.c.l.b16 %v110
    %v564 = vunpack.c.h.b16 %v110
    %v565 = vunpack.c.l.b16 %v111
    %v566 = vunpack.c.h.b16 %v111
    %v567 = vunpack.c.l.b16 %v112
    %v568 = vunpack.c.h.b16 %v112
    %v569 = vunpack.c.l.b16 %v113
    %v570 = vunpack.c.h.b16 %v113
    %v571 = vunpack.c.l.b16 %v114
    %v572 = vunpack.c.h.b16 %v114
    %v573 = vunpack.c.l.b16 %v115
    %v574 = vunpack.c.h.b16 %v115
    %v575 = vunpack.c.l.b16 %v116
    %v576 = vunpack.c.h.b16 %v116
    %v577 = vunpack.c.l.b16 %v117
    %v578 = vunpack.c.h.b16 %v117
    %v579 = vunpack.c.l.b16 %v118
    %v580 = vunpack.c.h.b16 %v118
    %v581 = vunpack.c.l.b16 %v119
    %v582 = vunpack.c.h.b16 %v119
    %v583 = vunpack.c.l.b16 %v120
    %v584 = vunpack.c.h.b16 %v120
    %v585 = vunpack.c.l.b16 %v121
    %v586 = vunpack.c.h.b16 %v121
    %v587 = vunpack.c.l.b16 %v122
    %v588 = vunpack.c.h.b16 %v122
    %v589 = vunpack.c.l.b16 %v123
    %v590 = vunpack.c.h.b16 %v123
    %v591 = vunpack.c.l.b16 %v124
    %v592 = vunpack.c.h.b16 %v124
    %v593 = vunpack.c.l.b16 %v125
    %v594 = vunpack.c.h.b16 %v125
    %v595 = vunpack.c.l.b16 %v126
    %v596 = vunpack.c.h.b16 %v126
    %v597 = vunpack.c.l.b16 %v127
    %v598 = vunpack.c.h.b16 %v127
    %v599 = vunpack.c.l.b16 %v128
    %v600 = vunpack.c.h.b16 %v128
    %v601 = vunpack.c.l.b16 %v129
    %v602 = vunpack.c.h.b16 %v129
    %v603 = vunpack.c.l.b16 %v130
    %v604 = vunpack.c.h.b16 %v130
    %v605 = vunpack.c.l.b16 %v131
    %v606 = vunpack.c.h.b16 %v131
    %v607 = vunpack.c.l.b16 %v132
    %v608 = vunpack.c.h.b16 %v132
    %v609 = vunpack.c.l.b16 %v133
    %v610 = vunpack.c.h.b16 %v133
    %v611 = vunpack.c.l.b16 %v134
    %v612 = vunpack.c.h.b16 %v134
    %v613 = vunpack.c.l.b16 %v135
    %v614 = vunpack.c.h.b16 %v135
    %v615 = vunpack.c.l.b16 %v136
    %v616 = vunpack.c.h.b16 %v136
    %v617 = vunpack.c.l.b16 %v137
    %v618 = vunpack.c.h.b16 %v137
    %v619 = vunpack.c.l.b16 %v138
    %v620 = vunpack.c.h.b16 %v138
    %v621 = vunpack.c.l.b16 %v139
    %v622 = vunpack.c.h.b16 %v139
    %v623 = vunpack.c.l.b16 %v140
    %v624 = vunpack.c.h.b16 %v140
    %v625 = vunpack.c.l.b16 %v141
    %v626 = vunpack.c.h.b16 %v141
    %v627 = vunpack.c.l.b16 %v142
    %v628 = vunpack.c.h.b16 %v142
    %v629 = vunpack.c.l.b16 %v143
    %v630 = vunpack.c.h.b16 %v143
    %v631 = vunpack.c.l.b16 %v144
    %v632 = vunpack.c.h.b16 %v144
    %v633 = vunpack.c.l.b16 %v145
    %v634 = vunpack.c.h.b16 %v145
    %v635 = vunpack.c.l.b16 %v146
    %v636 = vunpack.c.h.b16 %v146
    %v637 = vunpack.c.l.b16 %v147
    %v638 = vunpack.c.h.b16 %v147
    %v639 = vunpack.c.l.b16 %v148
    %v640 = vunpack.c.h.b16 %v148
    %v641 = vunpack.c.l.b16 %v149
    %v642 = vunpack.c.h.b16 %v149
    %v643 = vunpack.c.l.b16 %v150
    %v644 = vunpack.c.h.b16 %v150
    %v645 = vunpack.c.l.b16 %v151
    %v646 = vunpack.c.h.b16 %v151
    %v647 = vunpack.c.l.b16 %v152
    %v648 = vunpack.c.h.b16 %v152
    %v649 = vunpack.c.l.b16 %v153
    %v650 = vunpack.c.h.b16 %v153
    %v651 = vunpack.c.l.b16 %v154
    %v652 = vunpack.c.h.b16 %v154
    %v653 = vunpack.c.l.b16 %v155
    %v654 = vunpack.c.h.b16 %v155
    %v655 = vunpack.c.l.b16 %v156
    %v656 = vunpack.c.h.b16 %v156
    %v657 = vunpack.c.l.b16 %v157
    %v658 = vunpack.c.h.b16 %v157
    %v659 = vunpack.c.l.b16 %v158
    %v660 = vunpack.c.h.b16 %v158
    %v661 = vunpack.c.l.b16 %v159
    %v662 = vunpack.c.h.b16 %v159
    %v663 = vunpack.c.l.b16 %v160
    %v664 = vunpack.c.h.b16 %v160
    %v665 = vunpack.c.l.b16 %v161
    %v666 = vunpack.c.h.b16 %v161
    %v667 = vunpack.c.l.b16 %v162
    %v668 = vunpack.c.h.b16 %v162
    %v669 = vunpack.c.l.b16 %v163
    %v670 = vunpack.c.h.b16 %v163
    %v671 = vunpack.c.l.b16 %v164
    %v672 = vunpack.c.h.b16 %v164
    %v673 = vunpack.c.l.b16 %v165
    %v674 = vunpack.c.h.b16 %v165
    %v675 = vunpack.c.l.b16 %v166
    %v676 = vunpack.c.h.b16 %v166
    %v677 = vunpack.c.l.b16 %v167
    %v678 = vunpack.c.h.b16 %v167
    %v679 = vunpack.c.l.b16 %v168
    %v680 = vunpack.c.h.b16 %v168
    %v681 = vunpack.c.l.b16 %v169
    %v682 = vunpack.c.h.b16 %v169
    %v683 = vunpack.c.l.b16 %v170
    %v684 = vunpack.c.h.b16 %v170
    %v685 = vunpack.c.l.b16 %v171
    %v686 = vunpack.c.h.b16 %v171
    %v687 = vunpack.c.l.b16 %v172
    %v688 = vunpack.c.h.b16 %v172
    %v689 = vpack.c.b16 %v441, %v433
    %v690 = vpack.c.b16 %v442, %v434
    %v691 = vpack.c.b16 %v443, %v435
    %v692 = vpack.c.b16 %v444, %v436
    %v693 = vpack.c.b16 %v445, %v437
    %v694 = vpack.c.b16 %v446, %v438
    %v695 = vpack.c.b16 %v447, %v439
    %v696 = vpack.c.b16 %v448, %v440
    %v697 = vpack.c.b16 %v457, %v449
    %v698 = vpack.c.b16 %v458, %v450
    %v699 = vpack.c.b16 %v459, %v451
    %v700 = vpack.c.b16 %v460, %v452
    %v701 = vpack.c.b16 %v461, %v453
    %v702 = vpack.c.b16 %v462, %v454
    %v703 = vpack.c.b16 %v463, %v455
    %v704 = vpack.c.b16 %v464, %v456
    %v705 = vpack.c.b16 %v473, %v465
    %v706 = vpack.c.b16 %v474, %v466
    %v707 = vpack.c.b16 %v475, %v467
    %v708 = vpack.c.b16 %v476, %v468
    %v709 = vpack.c.b16 %v477, %v469
    %v710 = vpack.c.b16 %v478, %v470
    %v711 = vpack.c.b16 %v479, %v471
    %v712 = vpack.c.b16 %v480, %v472
    %v713 = vpack.c.b16 %v489, %v481
    %v714 = vpack.c.b16 %v490, %v482
    %v715 = vpack.c.b16 %v491, %v483
    %v716 = vpack.c.b16 %v492, %v484
    %v717 = vpack.c.b16 %v493, %v485
    %v718 = vpack.c.b16 %v494, %v486
    %v719 = vpack.c.b16 %v495, %v487
    %v720 = vpack.c.b16 %v496, %v488
    %v721 = vpack.c.b16 %v505, %v497
    %v722 = vpack.c.b16 %v506, %v498
    %v723 = vpack.c.b16 %v507, %v499
    %v724 = vpack.c.b16 %v508, %v500
    %v725 = vpack.c.b16 %v509, %v501
    %v726 = vpack.c.b16 %v510, %v502
    %v727 = vpack.c.b16 %v511, %v503
    %v728 = vpack.c.b16 %v512, %v504
    %v729 = vpack.c.b16 %v521, %v513
    %v730 = vpack.c.b16 %v522, %v514
    %v731 = vpack.c.b16 %v523, %v515
    %v732 = vpack.c.b16 %v524, %v516
    %v733 = vpack.c.b16 %v525, %v517
    %v734 = vpack.c.b16 %v526, %v518
    %v735 = vpack.c.b16 %v527, %v519
    %v736 = vpack.c.b16 %v528, %v520
    %v737 = vpack.c.b16 %v537, %v529
    %v738 = vpack.c.b16 %v538, %v530
    %v739 = vpack.c.b16 %v539, %v531
    %v740 = vpack.c.b16 %v540, %v532
    %v741 = vpack.c.b16 %v541, %v533
    %v742 = vpack.c.b16 %v542, %v534
    %v743 = vpack.c.b16 %v543, %v535
    %v744 = vpack.c.b16 %v544, %v536
    %v745 = vpack.c.b16 %v553, %v545
    %v746 = vpack.c.b16 %v554, %v546
    %v747 = vpack.c.b16 %v555, %v547
    %v748 = vpack.c.b16 %v556, %v548
    %v749 = vpack.c.b16 %v557, %v549
    %v750 = vpack.c.b16 %v558, %v550
    %v751 = vpack.c.b16 %v559, %v551
    %v752 = vpack.c.b16 %v560, %v552
    %v753 = vpack.c.b16 %v569, %v561
    %v754 = vpack.c.b16 %v570, %v562
    %v755 = vpack.c.b16 %v571, %v563
    %v756 = vpack.c.b16 %v572, %v564
    %v757 = vpack.c.b16 %v573, %v565
    %v758 = vpack.c.b16 %v574, %v566
    %v759 = vpack.c.b16 %v575, %v567
    %v760 = vpack.c.b16 %v576, %v568
    %v761 = vpack.c.b16 %v585, %v577
    %v762 = vpack.c.b16 %v586, %v578
    %v763 = vpack.c.b16 %v587, %v579
    %v764 = vpack.c.b16 %v588, %v580
    %v765 = vpack.c.b16 %v589, %v581
    %v766 = vpack.c.b16 %v590, %v582
    %v767 = vpack.c.b16 %v591, %v583
    %v768 = vpack.c.b16 %v592, %v584
    %v769 = vpack.c.b16 %v601, %v593
    %v770 = vpack.c.b16 %v602, %v594
    %v771 = vpack.c.b16 %v603, %v595
    %v772 = vpack.c.b16 %v604, %v596
    %v773 = vpack.c.b16 %v605, %v597
    %v774 = vpack.c.b16 %v606, %v598
    %v775 = vpack.c.b16 %v607, %v599
    %v776 = vpack.c.b16 %v608, %v600
    %v777 = vpack.c.b16 %v617, %v609
    %v778 = vpack.c.b16 %v618, %v610
    %v779 = vpack.c.b16 %v619, %v611
    %v780 = vpack.c.b16 %v620, %v612
    %v781 = vpack.c.b16 %v621, %v613
    %v782 = vpack.c.b16 %v622, %v614
    %v783 = vpack.c.b16 %v623, %v615
    %v784 = vpack.c.b16 %v624, %v616
    %v785 = vpack.c.b16 %v633, %v625
    %v786 = vpack.c.b16 %v634, %v626
    %v787 = vpack.c.b16 %v635, %v627
    %v788 = vpack.c.b16 %v636, %v628
    %v789 = vpack.c.b16 %v637, %v629
    %v790 = vpack.c.b16 %v638, %v630
    %v791 = vpack.c.b16 %v639, %v631
    %v792 = vpack.c.b16 %v640, %v632
    %v793 = vpack.c.b16 %v649, %v641
    %v794 = vpack.c.b16 %v650, %v642
    %v795 = vpack.c.b16 %v651, %v643
    %v796 = vpack.c.b16 %v652, %v644
    %v797 = vpack.c.b16 %v653, %v645
    %v798 = vpack.c.b16 %v654, %v646
    %v799 = vpack.c.b16 %v655, %v647
    %v800 = vpack.c.b16 %v656, %v648
    %v801 = vpack.c.b16 %v665, %v657
    %v802 = vpack.c.b16 %v666, %v658
    %v803 = vpack.c.b16 %v667, %v659
    %v804 = vpack.c.b16 %v668, %v660
    %v805 = vpack.c.b16 %v669, %v661
    %v806 = vpack.c.b16 %v670, %v662
    %v807 = vpack.c.b16 %v671, %v663
    %v808 = vpack.c.b16 %v672, %v664
    %v809 = vpack.c.b16 %v681, %v673
    %v810 = vpack.c.b16 %v682, %v674
    %v811 = vpack.c.b16 %v683, %v675
    %v812 = vpack.c.b16 %v684, %v676
    %v813 = vpack.c.b16 %v685, %v677
    %v814 = vpack.c.b16 %v686, %v678
    %v815 = vpack.c.b16 %v687, %v679
    %v816 = vpack.c.b16 %v688, %v680
    %v1073 = vunpack.c.l.b16 %v173
    %v1074 = vunpack.c.l.b16 %v174
    %v1075 = vunpack.c.l.b16 %v175
    %v1076 = vunpack.c.l.b16 %v176
    %v1077 = vunpack.c.l.b16 %v177
    %v1078 = vunpack.c.l.b16 %v178
    %v1079 = vunpack.c.l.b16 %v179
    %v1080 = vunpack.c.l.b16 %v180
    %v1081 = vunpack.c.l.b16 %v181
    %v1082 = vunpack.c.l.b16 %v182
    %v1083 = vunpack.c.l.b16 %v183
    %v1084 = vunpack.c.l.b16 %v184
    %v1085 = vunpack.c.l.b16 %v185
    %v1086 = vunpack.c.l.b16 %v186
    %v1087 = vunpack.c.l.b16 %v187
    %v1088 = vunpack.c.l.b16 %v188
    %v1089 = vunpack.c.l.b16 %v189
    %v1090 = vunpack.c.l.b16 %v190
    %v1091 = vunpack.c.l.b16 %v191
    %v1092 = vunpack.c.l.b16 %v192
    %v1093 = vunpack.c.l.b16 %v193
    %v1094 = vunpack.c.l.b16 %v194
    %v1095 = vunpack.c.l.b16 %v195
    %v1096 = vunpack.c.l.b16 %v196
    %v1097 = vunpack.c.l.b16 %v197
    %v1098 = vunpack.c.l.b16 %v198
    %v1099 = vunpack.c.l.b16 %v199
    %v1100 = vunpack.c.l.b16 %v200
    %v1101 = vunpack.c.l.b16 %v201
    %v1102 = vunpack.c.l.b16 %v202
    %v1103 = vunpack.c.l.b16 %v203
    %v1104 = vunpack.c.l.b16 %v204
    %v1105 = vunpack.c.l.b16 %v205
    %v1106 = vunpack.c.l.b16 %v206
    %v1107 = vunpack.c.l.b16 %v207
    %v1108 = vunpack.c.l.b16 %v208
    %v1109 = vunpack.c.l.b16 %v209
    %v1110 = vunpack.c.l.b16 %v210
    %v1111 = vunpack.c.l.b16 %v211
    %v1112 = vunpack.c.l.b16 %v212
    %v1113 = vunpack.c.l.b16 %v213
    %v1114 = vunpack.c.l.b16 %v214
    %v1115 = vunpack.c.l.b16 %v215
    %v1116 = vunpack.c.l.b16 %v216
    %v1117 = vunpack.c.l.b16 %v217
    %v1118 = vunpack.c.l.b16 %v218
    %v1119 = vunpack.c.l.b16 %v219
    %v1120 = vunpack.c.l.b16 %v220
    %v1121 = vunpack.c.l.b16 %v221
    %v1122 = vunpack.c.l.b16 %v222
    %v1123 = vunpack.c.l.b16 %v223
    %v1124 = vunpack.c.l.b16 %v224
    %v1125 = vunpack.c.l.b16 %v225
    %v1126 = vunpack.c.l.b16 %v226
    %v1127 = vunpack.c.l.b16 %v227
    %v1128 = vunpack.c.l.b16 %v228
    %v1129 = vunpack.c.l.b16 %v229
    %v1130 = vunpack.c.l.b16 %v230
    %v1131 = vunpack.c.l.b16 %v231
    %v1132 = vunpack.c.l.b16 %v232
    %v1133 = vunpack.c.l.b16 %v233
    %v1134 = vunpack.c.l.b16 %v234
    %v1135 = vunpack.c.l.b16 %v235
    %v1136 = vunpack.c.l.b16 %v236
    %v1137 = vunpack.c.l.b16 %v237
    %v1138 = vunpack.c.l.b16 %v238
    %v1139 = vunpack.c.l.b16 %v239
    %v1140 = vunpack.c.l.b16 %v240
    %v1141 = vunpack.c.l.b16 %v241
    %v1142 = vunpack.c.l.b16 %v242
    %v1143 = vunpack.c.l.b16 %v243
    %v1144 = vunpack.c.l.b16 %v244
    %v1145 = vunpack.c.l.b16 %v245
    %v1146 = vunpack.c.l.b16 %v246
    %v1147 = vunpack.c.l.b16 %v247
    %v1148 = vunpack.c.l.b16 %v248
    %v1149 = vunpack.c.l.b16 %v249
    %v1150 = vunpack.c.l.b16 %v250
    %v1151 = vunpack.c.l.b16 %v251
    %v1152 = vunpack.c.l.b16 %v252
    %v1153 = vunpack.c.l.b16 %v253
    %v1154 = vunpack.c.l.b16 %v254
    %v1155 = vunpack.c.l.b16 %v255
    %v1156 = vunpack.c.l.b16 %v256
    %v1157 = vunpack.c.l.b16 %v257
    %v1158 = vunpack.c.l.b16 %v258
    %v1159 = vunpack.c.l.b16 %v259
    %v1160 = vunpack.c.l.b16 %v260
    %v1161 = vunpack.c.l.b16 %v261
    %v1162 = vunpack.c.l.b16 %v262
    %v1163 = vunpack.c.l.b16 %v263
    %v1164 = vunpack.c.l.b16 %v264
    %v1165 = vunpack.c.l.b16 %v265
    %v1166 = vunpack.c.l.b16 %v266
    %v1167 = vunpack.c.l.b16 %v267
    %v1168 = vunpack.c.l.b16 %v268
    %v1169 = vunpack.c.l.b16 %v269
    %v1170 = vunpack.c.l.b16 %v270
    %v1171 = vunpack.c.l.b16 %v271
    %v1172 = vunpack.c.l.b16 %v272
    %v1173 = vunpack.c.l.b16 %v273
    %v1174 = vunpack.c.l.b16 %v274
    %v1175 = vunpack.c.l.b16 %v275
    %v1176 = vunpack.c.l.b16 %v276
    %v1177 = vunpack.c.l.b16 %v277
    %v1178 = vunpack.c.l.b16 %v278
    %v1179 = vunpack.c.l.b16 %v279
    %v1180 = vunpack.c.l.b16 %v280
    %v1181 = vunpack.c.l.b16 %v281
    %v1182 = vunpack.c.l.b16 %v282
    %v1183 = vunpack.c.l.b16 %v283
    %v1184 = vunpack.c.l.b16 %v284
    %v1185 = vunpack.c.l.b16 %v285
    %v1186 = vunpack.c.l.b16 %v286
    %v1187 = vunpack.c.l.b16 %v287
    %v1188 = vunpack.c.l.b16 %v288
    %v1189 = vunpack.c.l.b16 %v289
    %v1190 = vunpack.c.l.b16 %v290
    %v1191 = vunpack.c.l.b16 %v291
    %v1192 = vunpack.c.l.b16 %v292
    %v1193 = vunpack.c.l.b16 %v293
    %v1194 = vunpack.c.l.b16 %v294
    %v1195 = vunpack.c.l.b16 %v295
    %v1196 = vunpack.c.l.b16 %v296
    %v1197 = vunpack.c.l.b16 %v297
    %v1198 = vunpack.c.l.b16 %v298
    %v1199 = vunpack.c.l.b16 %v299
    %v1200 = vunpack.c.l.b16 %v300
    %v1201 = vpack.c.b16 %v1074, %v1073
    %v1202 = vpack.c.b16 %v1076, %v1075
    %v1203 = vpack.c.b16 %v1078, %v1077
    %v1204 = vpack.c.b16 %v1080, %v1079
    %v1205 = vpack.c.b16 %v1082, %v1081
    %v1206 = vpack.c.b16 %v1084, %v1083
    %v1207 = vpack.c.b16 %v1086, %v1085
    %v1208 = vpack.c.b16 %v1088, %v1087
    %v1209 = vpack.c.b16 %v1090, %v1089
    %v1210 = vpack.c.b16 %v1092, %v1091
    %v1211 = vpack.c.b16 %v1094, %v1093
    %v1212 = vpack.c.b16 %v1096, %v1095
    %v1213 = vpack.c.b16 %v1098, %v1097
    %v1214 = vpack.c.b16 %v1100, %v1099
    %v1215 = vpack.c.b16 %v1102, %v1101
    %v1216 = vpack.c.b16 %v1104, %v1103
    %v1217 = vpack.c.b16 %v1106, %v1105
    %v1218 = vpack.c.b16 %v1108, %v1107
    %v1219 = vpack.c.b16 %v1110, %v1109
    %v1220 = vpack.c.b16 %v1112, %v1111
    %v1221 = vpack.c.b16 %v1114, %v1113
    %v1222 = vpack.c.b16 %v1116, %v1115
    %v1223 = vpack.c.b16 %v1118, %v1117
    %v1224 = vpack.c.b16 %v1120, %v1119
    %v1225 = vpack.c.b16 %v1122, %v1121
    %v1226 = vpack.c.b16 %v1124, %v1123
    %v1227 = vpack.c.b16 %v1126, %v1125
    %v1228 = vpack.c.b16 %v1128, %v1127
    %v1229 = vpack.c.b16 %v1130, %v1129
    %v1230 = vpack.c.b16 %v1132, %v1131
    %v1231 = vpack.c.b16 %v1134, %v1133
    %v1232 = vpack.c.b16 %v1136, %v1135
    %v1233 = vpack.c.b16 %v1138, %v1137
    %v1234 = vpack.c.b16 %v1140, %v1139
    %v1235 = vpack.c.b16 %v1142, %v1141
    %v1236 = vpack.c.b16 %v1144, %v1143
    %v1237 = vpack.c.b16 %v1146, %v1145
    %v1238 = vpack.c.b16 %v1148, %v1147
    %v1239 = vpack.c.b16 %v1150, %v1149
    %v1240 = vpack.c.b16 %v1152, %v1151
    %v1241 = vpack.c.b16 %v1154, %v1153
    %v1242 = vpack.c.b16 %v1156, %v1155
    %v1243 = vpack.c.b16 %v1158, %v1157
    %v1244 = vpack.c.b16 %v1160, %v1159
    %v1245 = vpack.c.b16 %v1162, %v1161
    %v1246 = vpack.c.b16 %v1164, %v1163
    %v1247 = vpack.c.b16 %v1166, %v1165
    %v1248 = vpack.c.b16 %v1168, %v1167
    %v1249 = vpack.c.b16 %v1170, %v1169
    %v1250 = vpack.c.b16 %v1172, %v1171
    %v1251 = vpack.c.b16 %v1174, %v1173
    %v1252 = vpack.c.b16 %v1176, %v1175
    %v1253 = vpack.c.b16 %v1178, %v1177
    %v1254 = vpack.c.b16 %v1180, %v1179
    %v1255 = vpack.c.b16 %v1182, %v1181
    %v1256 = vpack.c.b16 %v1184, %v1183
    %v1257 = vpack.c.b16 %v1186, %v1185
    %v1258 = vpack.c.b16 %v1188, %v1187
    %v1259 = vpack.c.b16 %v1190, %v1189
    %v1260 = vpack.c.b16 %v1192, %v1191
    %v1261 = vpack.c.b16 %v1194, %v1193
    %v1262 = vpack.c.b16 %v1196, %v1195
    %v1263 = vpack.c.b16 %v1198, %v1197
    %v1264 = vpack.c.b16 %v1200, %v1199
    %1329 = vmatpush.bf16.msra.mxu0 %v1208
    %1330 = vmatpush.bf16.msra.mxu0 %v1207
    %1331 = vmatpush.bf16.msra.mxu0 %v1206
    %1332 = vmatpush.bf16.msra.mxu0 %v1205
    %1333 = vmatpush.bf16.msra.mxu0 %v1204
    %1334 = vmatpush.bf16.msra.mxu0 %v1203
    %1335 = vmatpush.bf16.msra.mxu0 %v1202
    %1336 = vmatpush.bf16.msra.mxu0 %v1201
    %1337 = vmatmul.bf16.gmra.mxu0 %v689
    %v1338 = vpop.f32.mrf.mxu0
    %v1339 = vadd.f32 %v303, %v1338
    %v1340 = vpop.f32.mrf.mxu0
    %v1341 = vadd.f32 %v303, %v1340
    %1342 = vmatmul.bf16.gmra.mxu0 %v697
    %v1343 = vpop.f32.mrf.mxu0
    %v1344 = vadd.f32 %v303, %v1343
    %v1345 = vpop.f32.mrf.mxu0
    %v1346 = vadd.f32 %v303, %v1345
    %1347 = vmatmul.bf16.gmra.mxu0 %v705
    %v1348 = vpop.f32.mrf.mxu0
    %v1349 = vadd.f32 %v303, %v1348
    %v1350 = vpop.f32.mrf.mxu0
    %v1351 = vadd.f32 %v303, %v1350
    %1352 = vmatmul.bf16.gmra.mxu0 %v713
    %v1353 = vpop.f32.mrf.mxu0
    %v1354 = vadd.f32 %v303, %v1353
    %v1355 = vpop.f32.mrf.mxu0
    %v1356 = vadd.f32 %v303, %v1355
    %1357 = vmatmul.bf16.gmra.mxu0 %v721
    %v1358 = vpop.f32.mrf.mxu0
    %v1359 = vadd.f32 %v303, %v1358
    %v1360 = vpop.f32.mrf.mxu0
    %v1361 = vadd.f32 %v303, %v1360
    %1362 = vmatmul.bf16.gmra.mxu0 %v729
    %v1363 = vpop.f32.mrf.mxu0
    %v1364 = vadd.f32 %v303, %v1363
    %v1365 = vpop.f32.mrf.mxu0
    %v1366 = vadd.f32 %v303, %v1365
    %1367 = vmatmul.bf16.gmra.mxu0 %v737
    %v1368 = vpop.f32.mrf.mxu0
    %v1369 = vadd.f32 %v303, %v1368
    %v1370 = vpop.f32.mrf.mxu0
    %v1371 = vadd.f32 %v303, %v1370
    %1372 = vmatmul.bf16.gmra.mxu0 %v745
    %v1373 = vpop.f32.mrf.mxu0
    %v1374 = vadd.f32 %v303, %v1373
    %v1375 = vpop.f32.mrf.mxu0
    %v1376 = vadd.f32 %v303, %v1375
    %1377 = vmatmul.bf16.gmra.mxu0 %v753
    %v1378 = vpop.f32.mrf.mxu0
    %v1379 = vadd.f32 %v303, %v1378
    %v1380 = vpop.f32.mrf.mxu0
    %v1381 = vadd.f32 %v303, %v1380
    %1382 = vmatmul.bf16.gmra.mxu0 %v761
    %v1383 = vpop.f32.mrf.mxu0
    %v1384 = vadd.f32 %v303, %v1383
    %v1385 = vpop.f32.mrf.mxu0
    %v1386 = vadd.f32 %v303, %v1385
    %1387 = vmatmul.bf16.gmra.mxu0 %v769
    %v1388 = vpop.f32.mrf.mxu0
    %v1389 = vadd.f32 %v303, %v1388
    %v1390 = vpop.f32.mrf.mxu0
    %v1391 = vadd.f32 %v303, %v1390
    %1392 = vmatmul.bf16.gmra.mxu0 %v777
    %v1393 = vpop.f32.mrf.mxu0
    %v1394 = vadd.f32 %v303, %v1393
    %v1395 = vpop.f32.mrf.mxu0
    %v1396 = vadd.f32 %v303, %v1395
    %1397 = vmatmul.bf16.gmra.mxu0 %v785
    %v1398 = vpop.f32.mrf.mxu0
    %v1399 = vadd.f32 %v303, %v1398
    %v1400 = vpop.f32.mrf.mxu0
    %v1401 = vadd.f32 %v303, %v1400
    %1402 = vmatmul.bf16.gmra.mxu0 %v793
    %v1403 = vpop.f32.mrf.mxu0
    %v1404 = vadd.f32 %v303, %v1403
    %v1405 = vpop.f32.mrf.mxu0
    %v1406 = vadd.f32 %v303, %v1405
    %1407 = vmatmul.bf16.gmra.mxu0 %v801
    %v1408 = vpop.f32.mrf.mxu0
    %v1409 = vadd.f32 %v303, %v1408
    %v1410 = vpop.f32.mrf.mxu0
    %v1411 = vadd.f32 %v303, %v1410
    %1412 = vmatmul.bf16.gmra.mxu0 %v809
    %v1413 = vpop.f32.mrf.mxu0
    %v1414 = vadd.f32 %v303, %v1413
    %v1415 = vpop.f32.mrf.mxu0
    %v1416 = vadd.f32 %v303, %v1415
    %1417 = vdwg.mxu0
    %1418 = vmatpush.bf16.msra.mxu0 %v1216
    %1419 = vmatpush.bf16.msra.mxu0 %v1215
    %1420 = vmatpush.bf16.msra.mxu0 %v1214
    %1421 = vmatpush.bf16.msra.mxu0 %v1213
    %1422 = vmatpush.bf16.msra.mxu0 %v1212
    %1423 = vmatpush.bf16.msra.mxu0 %v1211
    %1424 = vmatpush.bf16.msra.mxu0 %v1210
    %1425 = vmatpush.bf16.msra.mxu0 %v1209
    %1426 = vmatmul.bf16.gmra.mxu0 %v690
    %v1427 = vpop.f32.mrf.mxu0
    %v1428 = vadd.f32 %v1339, %v1427
    %v1429 = vpop.f32.mrf.mxu0
    %v1430 = vadd.f32 %v1341, %v1429
    %1431 = vmatmul.bf16.gmra.mxu0 %v698
    %v1432 = vpop.f32.mrf.mxu0
    %v1433 = vadd.f32 %v1344, %v1432
    %v1434 = vpop.f32.mrf.mxu0
    %v1435 = vadd.f32 %v1346, %v1434
    %1436 = vmatmul.bf16.gmra.mxu0 %v706
    %v1437 = vpop.f32.mrf.mxu0
    %v1438 = vadd.f32 %v1349, %v1437
    %v1439 = vpop.f32.mrf.mxu0
    %v1440 = vadd.f32 %v1351, %v1439
    %1441 = vmatmul.bf16.gmra.mxu0 %v714
    %v1442 = vpop.f32.mrf.mxu0
    %v1443 = vadd.f32 %v1354, %v1442
    %v1444 = vpop.f32.mrf.mxu0
    %v1445 = vadd.f32 %v1356, %v1444
    %1446 = vmatmul.bf16.gmra.mxu0 %v722
    %v1447 = vpop.f32.mrf.mxu0
    %v1448 = vadd.f32 %v1359, %v1447
    %v1449 = vpop.f32.mrf.mxu0
    %v1450 = vadd.f32 %v1361, %v1449
    %1451 = vmatmul.bf16.gmra.mxu0 %v730
    %v1452 = vpop.f32.mrf.mxu0
    %v1453 = vadd.f32 %v1364, %v1452
    %v1454 = vpop.f32.mrf.mxu0
    %v1455 = vadd.f32 %v1366, %v1454
    %1456 = vmatmul.bf16.gmra.mxu0 %v738
    %v1457 = vpop.f32.mrf.mxu0
    %v1458 = vadd.f32 %v1369, %v1457
    %v1459 = vpop.f32.mrf.mxu0
    %v1460 = vadd.f32 %v1371, %v1459
    %1461 = vmatmul.bf16.gmra.mxu0 %v746
    %v1462 = vpop.f32.mrf.mxu0
    %v1463 = vadd.f32 %v1374, %v1462
    %v1464 = vpop.f32.mrf.mxu0
    %v1465 = vadd.f32 %v1376, %v1464
    %1466 = vmatmul.bf16.gmra.mxu0 %v754
    %v1467 = vpop.f32.mrf.mxu0
    %v1468 = vadd.f32 %v1379, %v1467
    %v1469 = vpop.f32.mrf.mxu0
    %v1470 = vadd.f32 %v1381, %v1469
    %1471 = vmatmul.bf16.gmra.mxu0 %v762
    %v1472 = vpop.f32.mrf.mxu0
    %v1473 = vadd.f32 %v1384, %v1472
    %v1474 = vpop.f32.mrf.mxu0
    %v1475 = vadd.f32 %v1386, %v1474
    %1476 = vmatmul.bf16.gmra.mxu0 %v770
    %v1477 = vpop.f32.mrf.mxu0
    %v1478 = vadd.f32 %v1389, %v1477
    %v1479 = vpop.f32.mrf.mxu0
    %v1480 = vadd.f32 %v1391, %v1479
    %1481 = vmatmul.bf16.gmra.mxu0 %v778
    %v1482 = vpop.f32.mrf.mxu0
    %v1483 = vadd.f32 %v1394, %v1482
    %v1484 = vpop.f32.mrf.mxu0
    %v1485 = vadd.f32 %v1396, %v1484
    %1486 = vmatmul.bf16.gmra.mxu0 %v786
    %v1487 = vpop.f32.mrf.mxu0
    %v1488 = vadd.f32 %v1399, %v1487
    %v1489 = vpop.f32.mrf.mxu0
    %v1490 = vadd.f32 %v1401, %v1489
    %1491 = vmatmul.bf16.gmra.mxu0 %v794
    %v1492 = vpop.f32.mrf.mxu0
    %v1493 = vadd.f32 %v1404, %v1492
    %v1494 = vpop.f32.mrf.mxu0
    %v1495 = vadd.f32 %v1406, %v1494
    %1496 = vmatmul.bf16.gmra.mxu0 %v802
    %v1497 = vpop.f32.mrf.mxu0
    %v1498 = vadd.f32 %v1409, %v1497
    %v1499 = vpop.f32.mrf.mxu0
    %v1500 = vadd.f32 %v1411, %v1499
    %1501 = vmatmul.bf16.gmra.mxu0 %v810
    %v1502 = vpop.f32.mrf.mxu0
    %v1503 = vadd.f32 %v1414, %v1502
    %v1504 = vpop.f32.mrf.mxu0
    %v1505 = vadd.f32 %v1416, %v1504
    %1506 = vdwg.mxu0
    %1507 = vmatpush.bf16.msra.mxu0 %v1224
    %1508 = vmatpush.bf16.msra.mxu0 %v1223
    %1509 = vmatpush.bf16.msra.mxu0 %v1222
    %1510 = vmatpush.bf16.msra.mxu0 %v1221
    %1511 = vmatpush.bf16.msra.mxu0 %v1220
    %1512 = vmatpush.bf16.msra.mxu0 %v1219
    %1513 = vmatpush.bf16.msra.mxu0 %v1218
    %1514 = vmatpush.bf16.msra.mxu0 %v1217
    %1515 = vmatmul.bf16.gmra.mxu0 %v691
    %v1516 = vpop.f32.mrf.mxu0
    %v1517 = vadd.f32 %v1428, %v1516
    %v1518 = vpop.f32.mrf.mxu0
    %v1519 = vadd.f32 %v1430, %v1518
    %1520 = vmatmul.bf16.gmra.mxu0 %v699
    %v1521 = vpop.f32.mrf.mxu0
    %v1522 = vadd.f32 %v1433, %v1521
    %v1523 = vpop.f32.mrf.mxu0
    %v1524 = vadd.f32 %v1435, %v1523
    %1525 = vmatmul.bf16.gmra.mxu0 %v707
    %v1526 = vpop.f32.mrf.mxu0
    %v1527 = vadd.f32 %v1438, %v1526
    %v1528 = vpop.f32.mrf.mxu0
    %v1529 = vadd.f32 %v1440, %v1528
    %1530 = vmatmul.bf16.gmra.mxu0 %v715
    %v1531 = vpop.f32.mrf.mxu0
    %v1532 = vadd.f32 %v1443, %v1531
    %v1533 = vpop.f32.mrf.mxu0
    %v1534 = vadd.f32 %v1445, %v1533
    %1535 = vmatmul.bf16.gmra.mxu0 %v723
    %v1536 = vpop.f32.mrf.mxu0
    %v1537 = vadd.f32 %v1448, %v1536
    %v1538 = vpop.f32.mrf.mxu0
    %v1539 = vadd.f32 %v1450, %v1538
    %1540 = vmatmul.bf16.gmra.mxu0 %v731
    %v1541 = vpop.f32.mrf.mxu0
    %v1542 = vadd.f32 %v1453, %v1541
    %v1543 = vpop.f32.mrf.mxu0
    %v1544 = vadd.f32 %v1455, %v1543
    %1545 = vmatmul.bf16.gmra.mxu0 %v739
    %v1546 = vpop.f32.mrf.mxu0
    %v1547 = vadd.f32 %v1458, %v1546
    %v1548 = vpop.f32.mrf.mxu0
    %v1549 = vadd.f32 %v1460, %v1548
    %1550 = vmatmul.bf16.gmra.mxu0 %v747
    %v1551 = vpop.f32.mrf.mxu0
    %v1552 = vadd.f32 %v1463, %v1551
    %v1553 = vpop.f32.mrf.mxu0
    %v1554 = vadd.f32 %v1465, %v1553
    %1555 = vmatmul.bf16.gmra.mxu0 %v755
    %v1556 = vpop.f32.mrf.mxu0
    %v1557 = vadd.f32 %v1468, %v1556
    %v1558 = vpop.f32.mrf.mxu0
    %v1559 = vadd.f32 %v1470, %v1558
    %1560 = vmatmul.bf16.gmra.mxu0 %v763
    %v1561 = vpop.f32.mrf.mxu0
    %v1562 = vadd.f32 %v1473, %v1561
    %v1563 = vpop.f32.mrf.mxu0
    %v1564 = vadd.f32 %v1475, %v1563
    %1565 = vmatmul.bf16.gmra.mxu0 %v771
    %v1566 = vpop.f32.mrf.mxu0
    %v1567 = vadd.f32 %v1478, %v1566
    %v1568 = vpop.f32.mrf.mxu0
    %v1569 = vadd.f32 %v1480, %v1568
    %1570 = vmatmul.bf16.gmra.mxu0 %v779
    %v1571 = vpop.f32.mrf.mxu0
    %v1572 = vadd.f32 %v1483, %v1571
    %v1573 = vpop.f32.mrf.mxu0
    %v1574 = vadd.f32 %v1485, %v1573
    %1575 = vmatmul.bf16.gmra.mxu0 %v787
    %v1576 = vpop.f32.mrf.mxu0
    %v1577 = vadd.f32 %v1488, %v1576
    %v1578 = vpop.f32.mrf.mxu0
    %v1579 = vadd.f32 %v1490, %v1578
    %1580 = vmatmul.bf16.gmra.mxu0 %v795
    %v1581 = vpop.f32.mrf.mxu0
    %v1582 = vadd.f32 %v1493, %v1581
    %v1583 = vpop.f32.mrf.mxu0
    %v1584 = vadd.f32 %v1495, %v1583
    %1585 = vmatmul.bf16.gmra.mxu0 %v803
    %v1586 = vpop.f32.mrf.mxu0
    %v1587 = vadd.f32 %v1498, %v1586
    %v1588 = vpop.f32.mrf.mxu0
    %v1589 = vadd.f32 %v1500, %v1588
    %1590 = vmatmul.bf16.gmra.mxu0 %v811
    %v1591 = vpop.f32.mrf.mxu0
    %v1592 = vadd.f32 %v1503, %v1591
    %v1593 = vpop.f32.mrf.mxu0
    %v1594 = vadd.f32 %v1505, %v1593
    %1595 = vdwg.mxu0
    %1596 = vmatpush.bf16.msra.mxu0 %v1232
    %1597 = vmatpush.bf16.msra.mxu0 %v1231
    %1598 = vmatpush.bf16.msra.mxu0 %v1230
    %1599 = vmatpush.bf16.msra.mxu0 %v1229
    %1600 = vmatpush.bf16.msra.mxu0 %v1228
    %1601 = vmatpush.bf16.msra.mxu0 %v1227
    %1602 = vmatpush.bf16.msra.mxu0 %v1226
    %1603 = vmatpush.bf16.msra.mxu0 %v1225
    %1604 = vmatmul.bf16.gmra.mxu0 %v692
    %v1605 = vpop.f32.mrf.mxu0
    %v1606 = vadd.f32 %v1517, %v1605
    %v1607 = vpop.f32.mrf.mxu0
    %v1608 = vadd.f32 %v1519, %v1607
    %1609 = vmatmul.bf16.gmra.mxu0 %v700
    %v1610 = vpop.f32.mrf.mxu0
    %v1611 = vadd.f32 %v1522, %v1610
    %v1612 = vpop.f32.mrf.mxu0
    %v1613 = vadd.f32 %v1524, %v1612
    %1614 = vmatmul.bf16.gmra.mxu0 %v708
    %v1615 = vpop.f32.mrf.mxu0
    %v1616 = vadd.f32 %v1527, %v1615
    %v1617 = vpop.f32.mrf.mxu0
    %v1618 = vadd.f32 %v1529, %v1617
    %1619 = vmatmul.bf16.gmra.mxu0 %v716
    %v1620 = vpop.f32.mrf.mxu0
    %v1621 = vadd.f32 %v1532, %v1620
    %v1622 = vpop.f32.mrf.mxu0
    %v1623 = vadd.f32 %v1534, %v1622
    %1624 = vmatmul.bf16.gmra.mxu0 %v724
    %v1625 = vpop.f32.mrf.mxu0
    %v1626 = vadd.f32 %v1537, %v1625
    %v1627 = vpop.f32.mrf.mxu0
    %v1628 = vadd.f32 %v1539, %v1627
    %1629 = vmatmul.bf16.gmra.mxu0 %v732
    %v1630 = vpop.f32.mrf.mxu0
    %v1631 = vadd.f32 %v1542, %v1630
    %v1632 = vpop.f32.mrf.mxu0
    %v1633 = vadd.f32 %v1544, %v1632
    %1634 = vmatmul.bf16.gmra.mxu0 %v740
    %v1635 = vpop.f32.mrf.mxu0
    %v1636 = vadd.f32 %v1547, %v1635
    %v1637 = vpop.f32.mrf.mxu0
    %v1638 = vadd.f32 %v1549, %v1637
    %1639 = vmatmul.bf16.gmra.mxu0 %v748
    %v1640 = vpop.f32.mrf.mxu0
    %v1641 = vadd.f32 %v1552, %v1640
    %v1642 = vpop.f32.mrf.mxu0
    %v1643 = vadd.f32 %v1554, %v1642
    %1644 = vmatmul.bf16.gmra.mxu0 %v756
    %v1645 = vpop.f32.mrf.mxu0
    %v1646 = vadd.f32 %v1557, %v1645
    %v1647 = vpop.f32.mrf.mxu0
    %v1648 = vadd.f32 %v1559, %v1647
    %1649 = vmatmul.bf16.gmra.mxu0 %v764
    %v1650 = vpop.f32.mrf.mxu0
    %v1651 = vadd.f32 %v1562, %v1650
    %v1652 = vpop.f32.mrf.mxu0
    %v1653 = vadd.f32 %v1564, %v1652
    %1654 = vmatmul.bf16.gmra.mxu0 %v772
    %v1655 = vpop.f32.mrf.mxu0
    %v1656 = vadd.f32 %v1567, %v1655
    %v1657 = vpop.f32.mrf.mxu0
    %v1658 = vadd.f32 %v1569, %v1657
    %1659 = vmatmul.bf16.gmra.mxu0 %v780
    %v1660 = vpop.f32.mrf.mxu0
    %v1661 = vadd.f32 %v1572, %v1660
    %v1662 = vpop.f32.mrf.mxu0
    %v1663 = vadd.f32 %v1574, %v1662
    %1664 = vmatmul.bf16.gmra.mxu0 %v788
    %v1665 = vpop.f32.mrf.mxu0
    %v1666 = vadd.f32 %v1577, %v1665
    %v1667 = vpop.f32.mrf.mxu0
    %v1668 = vadd.f32 %v1579, %v1667
    %1669 = vmatmul.bf16.gmra.mxu0 %v796
    %v1670 = vpop.f32.mrf.mxu0
    %v1671 = vadd.f32 %v1582, %v1670
    %v1672 = vpop.f32.mrf.mxu0
    %v1673 = vadd.f32 %v1584, %v1672
    %1674 = vmatmul.bf16.gmra.mxu0 %v804
    %v1675 = vpop.f32.mrf.mxu0
    %v1676 = vadd.f32 %v1587, %v1675
    %v1677 = vpop.f32.mrf.mxu0
    %v1678 = vadd.f32 %v1589, %v1677
    %1679 = vmatmul.bf16.gmra.mxu0 %v812
    %v1680 = vpop.f32.mrf.mxu0
    %v1681 = vadd.f32 %v1592, %v1680
    %v1682 = vpop.f32.mrf.mxu0
    %v1683 = vadd.f32 %v1594, %v1682
    %1684 = vdwg.mxu0
    %1685 = vmatpush.bf16.msra.mxu0 %v1240
    %1686 = vmatpush.bf16.msra.mxu0 %v1239
    %1687 = vmatpush.bf16.msra.mxu0 %v1238
    %1688 = vmatpush.bf16.msra.mxu0 %v1237
    %1689 = vmatpush.bf16.msra.mxu0 %v1236
    %1690 = vmatpush.bf16.msra.mxu0 %v1235
    %1691 = vmatpush.bf16.msra.mxu0 %v1234
    %1692 = vmatpush.bf16.msra.mxu0 %v1233
    %1693 = vmatmul.bf16.gmra.mxu0 %v693
    %v1694 = vpop.f32.mrf.mxu0
    %v1695 = vadd.f32 %v1606, %v1694
    %v1696 = vpop.f32.mrf.mxu0
    %v1697 = vadd.f32 %v1608, %v1696
    %1698 = vmatmul.bf16.gmra.mxu0 %v701
    %v1699 = vpop.f32.mrf.mxu0
    %v1700 = vadd.f32 %v1611, %v1699
    %v1701 = vpop.f32.mrf.mxu0
    %v1702 = vadd.f32 %v1613, %v1701
    %1703 = vmatmul.bf16.gmra.mxu0 %v709
    %v1704 = vpop.f32.mrf.mxu0
    %v1705 = vadd.f32 %v1616, %v1704
    %v1706 = vpop.f32.mrf.mxu0
    %v1707 = vadd.f32 %v1618, %v1706
    %1708 = vmatmul.bf16.gmra.mxu0 %v717
    %v1709 = vpop.f32.mrf.mxu0
    %v1710 = vadd.f32 %v1621, %v1709
    %v1711 = vpop.f32.mrf.mxu0
    %v1712 = vadd.f32 %v1623, %v1711
    %1713 = vmatmul.bf16.gmra.mxu0 %v725
    %v1714 = vpop.f32.mrf.mxu0
    %v1715 = vadd.f32 %v1626, %v1714
    %v1716 = vpop.f32.mrf.mxu0
    %v1717 = vadd.f32 %v1628, %v1716
    %1718 = vmatmul.bf16.gmra.mxu0 %v733
    %v1719 = vpop.f32.mrf.mxu0
    %v1720 = vadd.f32 %v1631, %v1719
    %v1721 = vpop.f32.mrf.mxu0
    %v1722 = vadd.f32 %v1633, %v1721
    %1723 = vmatmul.bf16.gmra.mxu0 %v741
    %v1724 = vpop.f32.mrf.mxu0
    %v1725 = vadd.f32 %v1636, %v1724
    %v1726 = vpop.f32.mrf.mxu0
    %v1727 = vadd.f32 %v1638, %v1726
    %1728 = vmatmul.bf16.gmra.mxu0 %v749
    %v1729 = vpop.f32.mrf.mxu0
    %v1730 = vadd.f32 %v1641, %v1729
    %v1731 = vpop.f32.mrf.mxu0
    %v1732 = vadd.f32 %v1643, %v1731
    %1733 = vmatmul.bf16.gmra.mxu0 %v757
    %v1734 = vpop.f32.mrf.mxu0
    %v1735 = vadd.f32 %v1646, %v1734
    %v1736 = vpop.f32.mrf.mxu0
    %v1737 = vadd.f32 %v1648, %v1736
    %1738 = vmatmul.bf16.gmra.mxu0 %v765
    %v1739 = vpop.f32.mrf.mxu0
    %v1740 = vadd.f32 %v1651, %v1739
    %v1741 = vpop.f32.mrf.mxu0
    %v1742 = vadd.f32 %v1653, %v1741
    %1743 = vmatmul.bf16.gmra.mxu0 %v773
    %v1744 = vpop.f32.mrf.mxu0
    %v1745 = vadd.f32 %v1656, %v1744
    %v1746 = vpop.f32.mrf.mxu0
    %v1747 = vadd.f32 %v1658, %v1746
    %1748 = vmatmul.bf16.gmra.mxu0 %v781
    %v1749 = vpop.f32.mrf.mxu0
    %v1750 = vadd.f32 %v1661, %v1749
    %v1751 = vpop.f32.mrf.mxu0
    %v1752 = vadd.f32 %v1663, %v1751
    %1753 = vmatmul.bf16.gmra.mxu0 %v789
    %v1754 = vpop.f32.mrf.mxu0
    %v1755 = vadd.f32 %v1666, %v1754
    %v1756 = vpop.f32.mrf.mxu0
    %v1757 = vadd.f32 %v1668, %v1756
    %1758 = vmatmul.bf16.gmra.mxu0 %v797
    %v1759 = vpop.f32.mrf.mxu0
    %v1760 = vadd.f32 %v1671, %v1759
    %v1761 = vpop.f32.mrf.mxu0
    %v1762 = vadd.f32 %v1673, %v1761
    %1763 = vmatmul.bf16.gmra.mxu0 %v805
    %v1764 = vpop.f32.mrf.mxu0
    %v1765 = vadd.f32 %v1676, %v1764
    %v1766 = vpop.f32.mrf.mxu0
    %v1767 = vadd.f32 %v1678, %v1766
    %1768 = vmatmul.bf16.gmra.mxu0 %v813
    %v1769 = vpop.f32.mrf.mxu0
    %v1770 = vadd.f32 %v1681, %v1769
    %v1771 = vpop.f32.mrf.mxu0
    %v1772 = vadd.f32 %v1683, %v1771
    %1773 = vdwg.mxu0
    %1774 = vmatpush.bf16.msra.mxu0 %v1248
    %1775 = vmatpush.bf16.msra.mxu0 %v1247
    %1776 = vmatpush.bf16.msra.mxu0 %v1246
    %1777 = vmatpush.bf16.msra.mxu0 %v1245
    %1778 = vmatpush.bf16.msra.mxu0 %v1244
    %1779 = vmatpush.bf16.msra.mxu0 %v1243
    %1780 = vmatpush.bf16.msra.mxu0 %v1242
    %1781 = vmatpush.bf16.msra.mxu0 %v1241
    %1782 = vmatmul.bf16.gmra.mxu0 %v694
    %v1783 = vpop.f32.mrf.mxu0
    %v1784 = vadd.f32 %v1695, %v1783
    %v1785 = vpop.f32.mrf.mxu0
    %v1786 = vadd.f32 %v1697, %v1785
    %1787 = vmatmul.bf16.gmra.mxu0 %v702
    %v1788 = vpop.f32.mrf.mxu0
    %v1789 = vadd.f32 %v1700, %v1788
    %v1790 = vpop.f32.mrf.mxu0
    %v1791 = vadd.f32 %v1702, %v1790
    %1792 = vmatmul.bf16.gmra.mxu0 %v710
    %v1793 = vpop.f32.mrf.mxu0
    %v1794 = vadd.f32 %v1705, %v1793
    %v1795 = vpop.f32.mrf.mxu0
    %v1796 = vadd.f32 %v1707, %v1795
    %1797 = vmatmul.bf16.gmra.mxu0 %v718
    %v1798 = vpop.f32.mrf.mxu0
    %v1799 = vadd.f32 %v1710, %v1798
    %v1800 = vpop.f32.mrf.mxu0
    %v1801 = vadd.f32 %v1712, %v1800
    %1802 = vmatmul.bf16.gmra.mxu0 %v726
    %v1803 = vpop.f32.mrf.mxu0
    %v1804 = vadd.f32 %v1715, %v1803
    %v1805 = vpop.f32.mrf.mxu0
    %v1806 = vadd.f32 %v1717, %v1805
    %1807 = vmatmul.bf16.gmra.mxu0 %v734
    %v1808 = vpop.f32.mrf.mxu0
    %v1809 = vadd.f32 %v1720, %v1808
    %v1810 = vpop.f32.mrf.mxu0
    %v1811 = vadd.f32 %v1722, %v1810
    %1812 = vmatmul.bf16.gmra.mxu0 %v742
    %v1813 = vpop.f32.mrf.mxu0
    %v1814 = vadd.f32 %v1725, %v1813
    %v1815 = vpop.f32.mrf.mxu0
    %v1816 = vadd.f32 %v1727, %v1815
    %1817 = vmatmul.bf16.gmra.mxu0 %v750
    %v1818 = vpop.f32.mrf.mxu0
    %v1819 = vadd.f32 %v1730, %v1818
    %v1820 = vpop.f32.mrf.mxu0
    %v1821 = vadd.f32 %v1732, %v1820
    %1822 = vmatmul.bf16.gmra.mxu0 %v758
    %v1823 = vpop.f32.mrf.mxu0
    %v1824 = vadd.f32 %v1735, %v1823
    %v1825 = vpop.f32.mrf.mxu0
    %v1826 = vadd.f32 %v1737, %v1825
    %1827 = vmatmul.bf16.gmra.mxu0 %v766
    %v1828 = vpop.f32.mrf.mxu0
    %v1829 = vadd.f32 %v1740, %v1828
    %v1830 = vpop.f32.mrf.mxu0
    %v1831 = vadd.f32 %v1742, %v1830
    %1832 = vmatmul.bf16.gmra.mxu0 %v774
    %v1833 = vpop.f32.mrf.mxu0
    %v1834 = vadd.f32 %v1745, %v1833
    %v1835 = vpop.f32.mrf.mxu0
    %v1836 = vadd.f32 %v1747, %v1835
    %1837 = vmatmul.bf16.gmra.mxu0 %v782
    %v1838 = vpop.f32.mrf.mxu0
    %v1839 = vadd.f32 %v1750, %v1838
    %v1840 = vpop.f32.mrf.mxu0
    %v1841 = vadd.f32 %v1752, %v1840
    %1842 = vmatmul.bf16.gmra.mxu0 %v790
    %v1843 = vpop.f32.mrf.mxu0
    %v1844 = vadd.f32 %v1755, %v1843
    %v1845 = vpop.f32.mrf.mxu0
    %v1846 = vadd.f32 %v1757, %v1845
    %1847 = vmatmul.bf16.gmra.mxu0 %v798
    %v1848 = vpop.f32.mrf.mxu0
    %v1849 = vadd.f32 %v1760, %v1848
    %v1850 = vpop.f32.mrf.mxu0
    %v1851 = vadd.f32 %v1762, %v1850
    %1852 = vmatmul.bf16.gmra.mxu0 %v806
    %v1853 = vpop.f32.mrf.mxu0
    %v1854 = vadd.f32 %v1765, %v1853
    %v1855 = vpop.f32.mrf.mxu0
    %v1856 = vadd.f32 %v1767, %v1855
    %1857 = vmatmul.bf16.gmra.mxu0 %v814
    %v1858 = vpop.f32.mrf.mxu0
    %v1859 = vadd.f32 %v1770, %v1858
    %v1860 = vpop.f32.mrf.mxu0
    %v1861 = vadd.f32 %v1772, %v1860
    %1862 = vdwg.mxu0
    %1863 = vmatpush.bf16.msra.mxu0 %v1256
    %1864 = vmatpush.bf16.msra.mxu0 %v1255
    %1865 = vmatpush.bf16.msra.mxu0 %v1254
    %1866 = vmatpush.bf16.msra.mxu0 %v1253
    %1867 = vmatpush.bf16.msra.mxu0 %v1252
    %1868 = vmatpush.bf16.msra.mxu0 %v1251
    %1869 = vmatpush.bf16.msra.mxu0 %v1250
    %1870 = vmatpush.bf16.msra.mxu0 %v1249
    %1871 = vmatmul.bf16.gmra.mxu0 %v695
    %v1872 = vpop.f32.mrf.mxu0
    %v1873 = vadd.f32 %v1784, %v1872
    %v1874 = vpop.f32.mrf.mxu0
    %v1875 = vadd.f32 %v1786, %v1874
    %1876 = vmatmul.bf16.gmra.mxu0 %v703
    %v1877 = vpop.f32.mrf.mxu0
    %v1878 = vadd.f32 %v1789, %v1877
    %v1879 = vpop.f32.mrf.mxu0
    %v1880 = vadd.f32 %v1791, %v1879
    %1881 = vmatmul.bf16.gmra.mxu0 %v711
    %v1882 = vpop.f32.mrf.mxu0
    %v1883 = vadd.f32 %v1794, %v1882
    %v1884 = vpop.f32.mrf.mxu0
    %v1885 = vadd.f32 %v1796, %v1884
    %1886 = vmatmul.bf16.gmra.mxu0 %v719
    %v1887 = vpop.f32.mrf.mxu0
    %v1888 = vadd.f32 %v1799, %v1887
    %v1889 = vpop.f32.mrf.mxu0
    %v1890 = vadd.f32 %v1801, %v1889
    %1891 = vmatmul.bf16.gmra.mxu0 %v727
    %v1892 = vpop.f32.mrf.mxu0
    %v1893 = vadd.f32 %v1804, %v1892
    %v1894 = vpop.f32.mrf.mxu0
    %v1895 = vadd.f32 %v1806, %v1894
    %1896 = vmatmul.bf16.gmra.mxu0 %v735
    %v1897 = vpop.f32.mrf.mxu0
    %v1898 = vadd.f32 %v1809, %v1897
    %v1899 = vpop.f32.mrf.mxu0
    %v1900 = vadd.f32 %v1811, %v1899
    %1901 = vmatmul.bf16.gmra.mxu0 %v743
    %v1902 = vpop.f32.mrf.mxu0
    %v1903 = vadd.f32 %v1814, %v1902
    %v1904 = vpop.f32.mrf.mxu0
    %v1905 = vadd.f32 %v1816, %v1904
    %1906 = vmatmul.bf16.gmra.mxu0 %v751
    %v1907 = vpop.f32.mrf.mxu0
    %v1908 = vadd.f32 %v1819, %v1907
    %v1909 = vpop.f32.mrf.mxu0
    %v1910 = vadd.f32 %v1821, %v1909
    %1911 = vmatmul.bf16.gmra.mxu0 %v759
    %v1912 = vpop.f32.mrf.mxu0
    %v1913 = vadd.f32 %v1824, %v1912
    %v1914 = vpop.f32.mrf.mxu0
    %v1915 = vadd.f32 %v1826, %v1914
    %1916 = vmatmul.bf16.gmra.mxu0 %v767
    %v1917 = vpop.f32.mrf.mxu0
    %v1918 = vadd.f32 %v1829, %v1917
    %v1919 = vpop.f32.mrf.mxu0
    %v1920 = vadd.f32 %v1831, %v1919
    %1921 = vmatmul.bf16.gmra.mxu0 %v775
    %v1922 = vpop.f32.mrf.mxu0
    %v1923 = vadd.f32 %v1834, %v1922
    %v1924 = vpop.f32.mrf.mxu0
    %v1925 = vadd.f32 %v1836, %v1924
    %1926 = vmatmul.bf16.gmra.mxu0 %v783
    %v1927 = vpop.f32.mrf.mxu0
    %v1928 = vadd.f32 %v1839, %v1927
    %v1929 = vpop.f32.mrf.mxu0
    %v1930 = vadd.f32 %v1841, %v1929
    %1931 = vmatmul.bf16.gmra.mxu0 %v791
    %v1932 = vpop.f32.mrf.mxu0
    %v1933 = vadd.f32 %v1844, %v1932
    %v1934 = vpop.f32.mrf.mxu0
    %v1935 = vadd.f32 %v1846, %v1934
    %1936 = vmatmul.bf16.gmra.mxu0 %v799
    %v1937 = vpop.f32.mrf.mxu0
    %v1938 = vadd.f32 %v1849, %v1937
    %v1939 = vpop.f32.mrf.mxu0
    %v1940 = vadd.f32 %v1851, %v1939
    %1941 = vmatmul.bf16.gmra.mxu0 %v807
    %v1942 = vpop.f32.mrf.mxu0
    %v1943 = vadd.f32 %v1854, %v1942
    %v1944 = vpop.f32.mrf.mxu0
    %v1945 = vadd.f32 %v1856, %v1944
    %1946 = vmatmul.bf16.gmra.mxu0 %v815
    %v1947 = vpop.f32.mrf.mxu0
    %v1948 = vadd.f32 %v1859, %v1947
    %v1949 = vpop.f32.mrf.mxu0
    %v1950 = vadd.f32 %v1861, %v1949
    %1951 = vdwg.mxu0
    %1952 = vmatpush.bf16.msra.mxu0 %v1264
    %1953 = vmatpush.bf16.msra.mxu0 %v1263
    %1954 = vmatpush.bf16.msra.mxu0 %v1262
    %1955 = vmatpush.bf16.msra.mxu0 %v1261
    %1956 = vmatpush.bf16.msra.mxu0 %v1260
    %1957 = vmatpush.bf16.msra.mxu0 %v1259
    %1958 = vmatpush.bf16.msra.mxu0 %v1258
    %1959 = vmatpush.bf16.msra.mxu0 %v1257
    %1960 = vmatmul.bf16.gmra.mxu0 %v696
    %v1961 = vpop.f32.mrf.mxu0
    %v1962 = vadd.f32 %v1873, %v1961
    %v1963 = vpop.f32.mrf.mxu0
    %v1964 = vadd.f32 %v1875, %v1963
    %1965 = vmatmul.bf16.gmra.mxu0 %v704
    %v1966 = vpop.f32.mrf.mxu0
    %v1967 = vadd.f32 %v1878, %v1966
    %v1968 = vpop.f32.mrf.mxu0
    %v1969 = vadd.f32 %v1880, %v1968
    %1970 = vmatmul.bf16.gmra.mxu0 %v712
    %v1971 = vpop.f32.mrf.mxu0
    %v1972 = vadd.f32 %v1883, %v1971
    %v1973 = vpop.f32.mrf.mxu0
    %v1974 = vadd.f32 %v1885, %v1973
    %1975 = vmatmul.bf16.gmra.mxu0 %v720
    %v1976 = vpop.f32.mrf.mxu0
    %v1977 = vadd.f32 %v1888, %v1976
    %v1978 = vpop.f32.mrf.mxu0
    %v1979 = vadd.f32 %v1890, %v1978
    %1980 = vmatmul.bf16.gmra.mxu0 %v728
    %v1981 = vpop.f32.mrf.mxu0
    %v1982 = vadd.f32 %v1893, %v1981
    %v1983 = vpop.f32.mrf.mxu0
    %v1984 = vadd.f32 %v1895, %v1983
    %1985 = vmatmul.bf16.gmra.mxu0 %v736
    %v1986 = vpop.f32.mrf.mxu0
    %v1987 = vadd.f32 %v1898, %v1986
    %v1988 = vpop.f32.mrf.mxu0
    %v1989 = vadd.f32 %v1900, %v1988
    %1990 = vmatmul.bf16.gmra.mxu0 %v744
    %v1991 = vpop.f32.mrf.mxu0
    %v1992 = vadd.f32 %v1903, %v1991
    %v1993 = vpop.f32.mrf.mxu0
    %v1994 = vadd.f32 %v1905, %v1993
    %1995 = vmatmul.bf16.gmra.mxu0 %v752
    %v1996 = vpop.f32.mrf.mxu0
    %v1997 = vadd.f32 %v1908, %v1996
    %v1998 = vpop.f32.mrf.mxu0
    %v1999 = vadd.f32 %v1910, %v1998
    %2000 = vmatmul.bf16.gmra.mxu0 %v760
    %v2001 = vpop.f32.mrf.mxu0
    %v2002 = vadd.f32 %v1913, %v2001
    %v2003 = vpop.f32.mrf.mxu0
    %v2004 = vadd.f32 %v1915, %v2003
    %2005 = vmatmul.bf16.gmra.mxu0 %v768
    %v2006 = vpop.f32.mrf.mxu0
    %v2007 = vadd.f32 %v1918, %v2006
    %v2008 = vpop.f32.mrf.mxu0
    %v2009 = vadd.f32 %v1920, %v2008
    %2010 = vmatmul.bf16.gmra.mxu0 %v776
    %v2011 = vpop.f32.mrf.mxu0
    %v2012 = vadd.f32 %v1923, %v2011
    %v2013 = vpop.f32.mrf.mxu0
    %v2014 = vadd.f32 %v1925, %v2013
    %2015 = vmatmul.bf16.gmra.mxu0 %v784
    %v2016 = vpop.f32.mrf.mxu0
    %v2017 = vadd.f32 %v1928, %v2016
    %v2018 = vpop.f32.mrf.mxu0
    %v2019 = vadd.f32 %v1930, %v2018
    %2020 = vmatmul.bf16.gmra.mxu0 %v792
    %v2021 = vpop.f32.mrf.mxu0
    %v2022 = vadd.f32 %v1933, %v2021
    %v2023 = vpop.f32.mrf.mxu0
    %v2024 = vadd.f32 %v1935, %v2023
    %2025 = vmatmul.bf16.gmra.mxu0 %v800
    %v2026 = vpop.f32.mrf.mxu0
    %v2027 = vadd.f32 %v1938, %v2026
    %v2028 = vpop.f32.mrf.mxu0
    %v2029 = vadd.f32 %v1940, %v2028
    %2030 = vmatmul.bf16.gmra.mxu0 %v808
    %v2031 = vpop.f32.mrf.mxu0
    %v2032 = vadd.f32 %v1943, %v2031
    %v2033 = vpop.f32.mrf.mxu0
    %v2034 = vadd.f32 %v1945, %v2033
    %2035 = vmatmul.bf16.gmra.mxu0 %v816
    %v2036 = vpop.f32.mrf.mxu0
    %v2037 = vadd.f32 %v1948, %v2036
    %v2038 = vpop.f32.mrf.mxu0
    %v2039 = vadd.f32 %v1950, %v2038
    %2040 = vdwg.mxu0
    %v2041 = vmax.f32 %v1962, 0.0
    %v2042 = vmax.f32 %v1964, 0.0
    %v2043 = vmax.f32 %v1967, 0.0
    %v2044 = vmax.f32 %v1969, 0.0
    %v2045 = vmax.f32 %v1972, 0.0
    %v2046 = vmax.f32 %v1974, 0.0
    %v2047 = vmax.f32 %v1977, 0.0
    %v2048 = vmax.f32 %v1979, 0.0
    %v2049 = vmax.f32 %v1982, 0.0
    %v2050 = vmax.f32 %v1984, 0.0
    %v2051 = vmax.f32 %v1987, 0.0
    %v2052 = vmax.f32 %v1989, 0.0
    %v2053 = vmax.f32 %v1992, 0.0
    %v2054 = vmax.f32 %v1994, 0.0
    %v2055 = vmax.f32 %v1997, 0.0
    %v2056 = vmax.f32 %v1999, 0.0
    %v2057 = vmax.f32 %v2002, 0.0
    %v2058 = vmax.f32 %v2004, 0.0
    %v2059 = vmax.f32 %v2007, 0.0
    %v2060 = vmax.f32 %v2009, 0.0
    %v2061 = vmax.f32 %v2012, 0.0
    %v2062 = vmax.f32 %v2014, 0.0
    %v2063 = vmax.f32 %v2017, 0.0
    %v2064 = vmax.f32 %v2019, 0.0
    %v2065 = vmax.f32 %v2022, 0.0
    %v2066 = vmax.f32 %v2024, 0.0
    %v2067 = vmax.f32 %v2027, 0.0
    %v2068 = vmax.f32 %v2029, 0.0
    %v2069 = vmax.f32 %v2032, 0.0
    %v2070 = vmax.f32 %v2034, 0.0
    %v2071 = vmax.f32 %v2037, 0.0
    %v2072 = vmax.f32 %v2039, 0.0
    %v2073 = vld [vmem:[#allocation2] sm:$0xff]
    %v2074 = vld [vmem:[%s3] sm:$0xff]
    %v2075 = vld [vmem:[%s3 + $0x8] sm:$0xff]
    %2076 = vmatpush.msra.mxu0 %v2056
    %2077 = vmatpush.msra.mxu0 %v2055
    %2078 = vmatpush.msra.mxu0 %v2054
    %2079 = vmatpush.msra.mxu0 %v2053
    %2080 = vmatpush.msra.mxu0 %v2052
    %2081 = vmatpush.msra.mxu0 %v2051
    %2082 = vmatpush.msra.mxu0 %v2050
    %2083 = vmatpush.msra.mxu0 %v2049
    %2084 = vmatpush.msra.mxu0 %v2048
    %2085 = vmatpush.msra.mxu0 %v2047
    %2086 = vmatpush.msra.mxu0 %v2046
    %2087 = vmatpush.msra.mxu0 %v2045
    %2088 = vmatpush.msra.mxu0 %v2044
    %2089 = vmatpush.msra.mxu0 %v2043
    %2090 = vmatpush.msra.mxu0 %v2042
    %2091 = vmatpush.msra.mxu0 %v2041
    %2092 = vmatmul.f32.gmra.mxu0 %v2074
    %v2093 = vpop.f32.mrf.mxu0
    %v2094 = vadd.f32 0.0, %v2093
    %2095 = vdwg.mxu0
    %2096 = vmatpush.msra.mxu0 %v2072
    %2097 = vmatpush.msra.mxu0 %v2071
    %2098 = vmatpush.msra.mxu0 %v2070
    %2099 = vmatpush.msra.mxu0 %v2069
    %2100 = vmatpush.msra.mxu0 %v2068
    %2101 = vmatpush.msra.mxu0 %v2067
    %2102 = vmatpush.msra.mxu0 %v2066
    %2103 = vmatpush.msra.mxu0 %v2065
    %2104 = vmatpush.msra.mxu0 %v2064
    %2105 = vmatpush.msra.mxu0 %v2063
    %2106 = vmatpush.msra.mxu0 %v2062
    %2107 = vmatpush.msra.mxu0 %v2061
    %2108 = vmatpush.msra.mxu0 %v2060
    %2109 = vmatpush.msra.mxu0 %v2059
    %2110 = vmatpush.msra.mxu0 %v2058
    %2111 = vmatpush.msra.mxu0 %v2057
    %2112 = vmatmul.f32.gmra.mxu0 %v2075
    %v2113 = vpop.f32.mrf.mxu0
    %v2114 = vadd.f32 %v2094, %v2113
    %2115 = vdwg.mxu0
    %v2116 = vadd.f32 %v2073, %v2114
    %vm2117 = vcmask 261120
    %2118 = vst.msk [vmem:[#allocation2] sm:$0xff] %vm2117, %v2116
    // Predicated region
    $region34: #{tpu_custom_call.1} parent=1 // pred_check
      %p2119 = pneg %p39
    $region35: #{tpu_custom_call.1} parent=1 // pred_check_branch
      %2121 = sbr.rel (%p2119) target = $region37
    $region36: #{tpu_custom_call.1} parent=1 // pred_region
      %v2122 = vld [vmem:[#allocation2] sm:$0xff]
      %v2123 = vld [vmem:[%s4] sm:$0xff]
      %v2124 = vld [vmem:[%s4 + $0x8] sm:$0xff]
      %v2125 = vld [vmem:[%s4 + $0x10] sm:$0xff]
      %v2126 = vld [vmem:[%s4 + $0x18] sm:$0xff]
      %v2127 = vld [vmem:[%s5] sm:$0x1]
      %v2129 = vperm.slane %v2127, 0
      %v2132 = vsel %vm2117, %v2122, 0
      %2134 = vmatpush.msra.mxu0 0.0
      %2135 = vmatpush.msra.mxu0 0.0
      %2136 = vmatpush.msra.mxu0 0.0
      %2137 = vmatpush.msra.mxu0 0.0
      %2138 = vmatpush.msra.mxu0 0.0
      %2139 = vmatpush.msra.mxu0 0.0
      %2140 = vmatpush.msra.mxu0 0.0
      %2141 = vmatpush.msra.mxu0 0.0
      %2142 = vmatpush.msra.mxu0 0.0
      %2143 = vmatpush.msra.mxu0 0.0
      %2144 = vmatpush.msra.mxu0 0.0
      %2145 = vmatpush.msra.mxu0 0.0
      %2146 = vmatpush.msra.mxu0 %v2126
      %2147 = vmatpush.msra.mxu0 %v2125
      %2148 = vmatpush.msra.mxu0 %v2124
      %2149 = vmatpush.msra.mxu0 %v2123
      %2150 = vmatmul.f32.gmra.mxu0 %v2132
      %v2151 = vpop.f32.mrf.mxu0
      %v2152 = vadd.f32 %v2129, %v2151
      %2153 = vdwg.mxu0
      %vm2154 = vcmask 15360
      %2155 = vst.msk [vmem:[%s6] sm:$0xff] %vm2154, %v2152
    $region37: #{tpu_custom_call.1} parent=1 // pred_fallthru
      _
    // Predicated region
    $region38: #{tpu_custom_call.1} parent=1 // pred_check
      _
    $region39: #{tpu_custom_call.1} parent=1 // pred_check_branch
      %2157 = sbr.rel (0) target = $region41
    $region40: #{tpu_custom_call.1} parent=1 // pred_region
      _
    $region41: #{tpu_custom_call.1} parent=1 // pred_fallthru
      _
    // Predicated region
    $region42: #{tpu_custom_call.1} parent=1 // pred_check
      _
    $region43: #{tpu_custom_call.1} parent=1 // pred_check_branch
      %2159 = sbr.rel (0) target = $region45
    $region44: #{tpu_custom_call.1} parent=1 // pred_region
      _
    $region45: #{tpu_custom_call.1} parent=1 // pred_fallthru
      _
    %2160 = vsyncpa [#allocation4], 1

</llo_original>
